<compile_context>
chip_gen: v6e
topology: v6e:2x2x1
jax: 0.10.0
libtpu: 0.0.40
codegen_flags: <defaults>
</compile_context>

<pallas_src>
from functools import partial

import numpy as np
import jax
import jax.numpy as jnp
from jax import lax
from jax.experimental import pallas as pl
from jax.experimental.pallas import tpu as pltpu

EMBIN    = 512 * 2 + 8   # 1032 input channels (embin_size)
EMB      = 256           # emb_size
CAM      = 20            # cam_size
NCLS     = 2
NCLS_SUB = 8             # classes padded to 8 sublanes for the transposed cam store


def _round_up(x, m):
    return (x + m - 1) // m * m


# --------------------------------------------------------------------------
# Pallas kernel (per ROI):
#   roi_align (as matmul S @ g)  ->  +b1, ReLU        (ConvBNReLU #1, conv hoisted)
#   bilinear resize to 20x20 (matmul R @ h1)
#   ConvBNReLU 256->128 (matmul)  ->  1x1 conv 128->2 (computed transposed)
# All matmul operands bf16, accumulation f32.
# --------------------------------------------------------------------------
def _head_kernel(bidx_ref, s_ref, g_ref, b1_ref, r_ref, w2_ref, b2_ref,
                 w3t_ref, b3t_ref, cam_ref):
    del bidx_ref                                     # consumed by the index_maps only
    s = s_ref[0]                                     # (HWr_pad, HWf_pad) bf16
    g = g_ref[0]                                     # (HWf_pad, 256)     bf16
    # roi_align as a matmul over the conv1'd feature map, then bias + ReLU.
    roi1 = jnp.dot(s, g, preferred_element_type=jnp.float32)            # (HWr_pad, 256) f32
    h1 = jnp.maximum(roi1 + b1_ref[...], 0.0).astype(jnp.bfloat16)
    # Bilinear resize (align_corners=True) to 20x20 as a matmul.  R's padded
    # columns are zero, so the padded (relu(b1)) rows of h1 never contribute.
    r = jnp.dot(r_ref[...], h1, preferred_element_type=jnp.float32)     # (400, 256) f32
    # ConvBNReLU 256 -> 128.
    h2 = jnp.maximum(
        jnp.dot(r.astype(jnp.bfloat16), w2_ref[...],
                preferred_element_type=jnp.float32) + b2_ref[...], 0.0)  # (400, 128) f32
    h2b = h2.astype(jnp.bfloat16)
    # Final 1x1 conv 128 -> 2, computed transposed so the cam store is
    # (8 sublanes, 400 lanes) instead of a 64x zero-padded (400, 128) slab:
    # out_t[c, q] = sum_d w3t[c, d] * h2[q, d]
    out_t = lax.dot_general(w3t_ref[...], h2b, (((1,), (1,)), ((), ())),
                            preferred_element_type=jnp.float32) + b3t_ref[...]
    cam_ref[...] = out_t[None]                                           # (1, 8, 400) f32


def run_head(bidx, S, g, b1, R, w2, b2, w3t, b3t):
    """bidx: (K,) int32 image index per ROI (scalar-prefetched).
       S:    (K, HWr_pad, HWf_pad) bf16 ROI sampling matrices.
       g:    (B, HWf_pad, 256)     bf16 per-image conv1 output (no bias).
       Returns cam_t: (K, 8, 400) f32 (classes on sublanes, spatial on lanes)."""
    K, HWr_pad, HWf_pad = S.shape
    C1 = g.shape[2]
    C2 = w2.shape[1]
    QQ = R.shape[0]          # 400
    NP = w3t.shape[0]        # 8

    return pl.pallas_call(
        _head_kernel,
        out_shape=jax.ShapeDtypeStruct((K, NP, QQ), jnp.float32),
        grid_spec=pltpu.PrefetchScalarGridSpec(
            num_scalar_prefetch=1,
            grid=(K,),
            in_specs=[
                pl.BlockSpec((1, HWr_pad, HWf_pad), lambda k, bi: (k, 0, 0)),
                # data-dependent image select via the scalar-prefetched ROI batch idx
                pl.BlockSpec((1, HWf_pad, C1),      lambda k, bi: (bi[k], 0, 0)),
                pl.BlockSpec((1, C1),               lambda k, bi: (0, 0)),
                pl.BlockSpec((QQ, HWr_pad),         lambda k, bi: (0, 0)),
                pl.BlockSpec((C1, C2),              lambda k, bi: (0, 0)),
                pl.BlockSpec((1, C2),               lambda k, bi: (0, 0)),
                pl.BlockSpec((NP, C2),              lambda k, bi: (0, 0)),
                pl.BlockSpec((NP, 1),               lambda k, bi: (0, 0)),
            ],
            out_specs=pl.BlockSpec((1, NP, QQ), lambda k, bi: (k, 0, 0)),
        ),
        compiler_params=pltpu.CompilerParams(
            # ROIs are independent; keeping >= 2 grid steps lets v7x use both TCs.
            dimension_semantics=("parallel",),
            vmem_limit_bytes=32 << 20),
    )(bidx, S, g, b1, R, w2, b2, w3t, b3t)


# --------------------------------------------------------------------------
# Parameters: BatchNorm folded into the 1x1 convs; final conv kept as a
# (8, 128) transposed weight (2 real class rows + 6 zero rows).
# --------------------------------------------------------------------------
def make_head_params(key):
    ks = jax.random.split(key, 12)

    def conv_bn(kw, kg, kb, km, kv, cin, cout):
        w = jax.random.normal(kw, (cout, cin), jnp.float32) / np.sqrt(cin)
        gamma = 1.0 + 0.1 * jax.random.normal(kg, (cout,), jnp.float32)
        beta = 0.1 * jax.random.normal(kb, (cout,), jnp.float32)
        mean = 0.1 * jax.random.normal(km, (cout,), jnp.float32)
        var = jnp.abs(1.0 + 0.1 * jax.random.normal(kv, (cout,), jnp.float32))
        scale = gamma / jnp.sqrt(var + 1e-5)
        w_eff = (w * scale[:, None]).T          # (cin, cout)
        b_eff = (beta - mean * scale)[None, :]  # (1, cout)
        return w_eff, b_eff

    w1, b1 = conv_bn(*ks[0:5], EMBIN, EMB)
    w2, b2 = conv_bn(*ks[5:10], EMB, EMB // 2)
    w3_real = (jax.random.normal(ks[10], (NCLS, EMB // 2), jnp.float32)
               / np.sqrt(EMB // 2))                                     # (2, 128)
    b3_real = 0.1 * jax.random.normal(ks[11], (NCLS,), jnp.float32)     # (2,)
    w3t = jnp.zeros((NCLS_SUB, EMB // 2), jnp.float32).at[:NCLS, :].set(w3_real)
    b3t = jnp.zeros((NCLS_SUB, 1), jnp.float32).at[:NCLS, 0].set(b3_real)
    return w1, b1, w2, b2, w3t, b3t


def _lin_interp_matrix(out_size, in_size):
    """1-D bilinear (align_corners=True) resize as a matrix (out_size, in_size)."""
    if in_size == 1:
        return np.ones((out_size, 1), np.float32)
    src = np.arange(out_size, dtype=np.float64) * (in_size - 1) / (out_size - 1)
    i0 = np.floor(src).astype(np.int64)
    i1 = np.minimum(i0 + 1, in_size - 1)
    f = (src - i0).astype(np.float32)
    M = np.zeros((out_size, in_size), np.float32)
    M[np.arange(out_size), i0] += 1.0 - f
    M[np.arange(out_size), i1] += f
    return M


def make_resize_matrix(in_h, in_w):
    My = _lin_interp_matrix(CAM, in_h)
    Mx = _lin_interp_matrix(CAM, in_w)
    R = (My[:, None, :, None] * Mx[None, :, None, :]).reshape(CAM * CAM, in_h * in_w)
    return jnp.asarray(R, jnp.float32)


# --------------------------------------------------------------------------
# roi_align as a matrix: S[k] has shape (out_h*out_w, H*W), row (ph,pw) holds
# the bilinear sampling weights of that bin averaged over sampling_ratio^2
# points (separable in y/x -> built from two small outer products; no gather).
# --------------------------------------------------------------------------
def make_roi_sampler(rois, spatial_scale, H, W, out_h, out_w, sampling_ratio=2):
    sr = sampling_ratio

    def one(roi):
        x1 = roi[1] * spatial_scale
        y1 = roi[2] * spatial_scale
        x2 = roi[3] * spatial_scale
        y2 = roi[4] * spatial_scale
        roi_w = jnp.maximum(x2 - x1, 1.0)
        roi_h = jnp.maximum(y2 - y1, 1.0)
        bin_w = roi_w / out_w
        bin_h = roi_h / out_h
        off = (jnp.arange(sr, dtype=jnp.float32) + 0.5) / sr
        ys = (y1 + (jnp.arange(out_h, dtype=jnp.float32)[:, None] + off[None, :]) * bin_h).reshape(-1)
        xs = (x1 + (jnp.arange(out_w, dtype=jnp.float32)[:, None] + off[None, :]) * bin_w).reshape(-1)

        def axis_w(c, n):
            valid = (c > -1.0) & (c < n)
            cc = jnp.clip(c, 0.0, n - 1.0)
            c0 = jnp.floor(cc)
            c1 = jnp.minimum(c0 + 1.0, n - 1.0)
            f = cc - c0
            idx = jnp.arange(n, dtype=jnp.float32)
            w = ((1.0 - f)[:, None] * (idx[None, :] == c0[:, None]).astype(jnp.float32)
                 + f[:, None] * (idx[None, :] == c1[:, None]).astype(jnp.float32))
            return w * valid[:, None].astype(jnp.float32)      # (npts, n)

        AY = axis_w(ys, H).reshape(out_h, sr, H).sum(axis=1)   # (out_h, H)
        AX = axis_w(xs, W).reshape(out_w, sr, W).sum(axis=1)   # (out_w, W)
        S = (AY[:, None, :, None] * AX[None, :, None, :]).reshape(out_h * out_w, H * W)
        return S / float(sr * sr)

    return jax.vmap(one)(rois)                                 # (K, out_h*out_w, H*W)


@partial(jax.jit, static_argnames=("roi_size",))
def scale_forward(feat, rois, w1, b1, R, w2, b2, w3t, b3t, spatial_scale, *, roi_size):
    """feat: (B, Cin, H, W) NCHW; rois: (K, 5) = [batch_idx, x1, y1, x2, y2].
       Returns cam (K, 2, 20, 20) NCHW and score (K, 2) (== AvgPool2d(20).squeeze())."""
    B, Cin, H, W = feat.shape
    K = rois.shape[0]
    HWf = H * W
    HWr = roi_size * roi_size
    HWf_pad = _round_up(HWf, 128)
    HWr_pad = _round_up(HWr, 128)

    # Hoisted per-image 1x1 conv (BN folded, no bias): exact by linearity since
    # roi_align is linear over spatial positions; bias + ReLU stay in-kernel.
    feat_flat = feat.reshape(B, Cin, HWf)
    g = jnp.einsum('bcp,ce->bpe', feat_flat.astype(jnp.bfloat16),
                   w1.astype(jnp.bfloat16),
                   preferred_element_type=jnp.float32).astype(jnp.bfloat16)
    g = jnp.pad(g, ((0, 0), (0, HWf_pad - HWf), (0, 0)))                # (B, HWf_pad, 256)

    # ROI sampling matrices, zero-padded to lane-dense (multiple-of-128) shapes.
    S = make_roi_sampler(rois, spatial_scale, H, W, roi_size, roi_size)
    S = jnp.pad(S, ((0, 0), (0, HWr_pad - HWr), (0, HWf_pad - HWf))).astype(jnp.bfloat16)

    Rp = jnp.pad(R, ((0, 0), (0, HWr_pad - HWr))).astype(jnp.bfloat16)  # (400, HWr_pad)

    bidx = rois[:, 0].astype(jnp.int32)

    cam_t = run_head(bidx, S, g, b1, Rp,
                     w2.astype(jnp.bfloat16), b2,
                     w3t.astype(jnp.bfloat16), b3t)                     # (K, 8, 400) f32

    cam2 = cam_t[:, :NCLS, :]                                           # (K, 2, 400)
    cam = cam2.reshape(K, NCLS, CAM, CAM)                               # NCHW, no transpose
    score = jnp.mean(cam2, axis=-1)                                     # AvgPool2d(20).squeeze()
    return cam, score


# --------------------------------------------------------------------------
if __name__ == "__main__":
    key = jax.random.PRNGKey(0)
    B = 2
    IM_SIZE = 64  # args.size (divisible by 32)

    kfeat, kparam = jax.random.split(key)

    # intmd_fea: 3 scales of (B, 1032, grid, grid) feature maps (NCHW, like PyTorch)
    intmd_fea = []
    for s in range(3):
        grid = IM_SIZE // (32 // 2 ** s)
        kfeat, k = jax.random.split(kfeat)
        intmd_fea.append(jax.random.normal(k, (B, EMBIN, grid, grid), jnp.float32))

    # seg_bbox (eval path): (B, 4) = [x1, y1, x2, y2] in image coords
    seg_bbox = jnp.array([[5.0, 8.0, 40.0, 50.0],
                          [10.0, 12.0, 55.0, 60.0]], jnp.float32)
    rois_batch = jnp.concatenate(
        [jnp.arange(B, dtype=jnp.float32)[:, None], seg_bbox], axis=1)  # (B, 5)

    cams, bi_scores = [], []
    for s in range(3):
        grid_size = 32 // 2 ** s
        roi_size = (s + 1) * 7

        kparam, kp = jax.random.split(kparam)
        w1, b1, w2, b2, w3t, b3t = make_head_params(kp)
        R = make_resize_matrix(roi_size, roi_size)

        cam, score = scale_forward(intmd_fea[s], rois_batch,
                                   w1, b1, R, w2, b2, w3t, b3t,
                                   1.0 / grid_size, roi_size=roi_size)
        cams.append(cam)          # (B, 2, 20, 20)  -- NCHW like PyTorch cam[ii]
        bi_scores.append(score)   # (B, 2)          -- like avg_pool(cam).squeeze()

    jax.block_until_ready((cams, bi_scores))
    assert all(c.shape == (B, NCLS, CAM, CAM) for c in cams)
    assert all(sc.shape == (B, NCLS) for sc in bi_scores)
    print("KERNEL_OK")
</pallas_src>

<mosaic_0001>
module attributes {stable_mosaic.version = 11 : i64} {
  func.func @_head_kernel(%arg0: i32, %arg1: memref<2xi32, #tpu.memory_space<smem>>, %arg2: memref<1x128x128xbf16, #tpu.memory_space<vmem>>, %arg3: memref<1x128x256xbf16, #tpu.memory_space<vmem>>, %arg4: memref<1x256xf32, #tpu.memory_space<vmem>>, %arg5: memref<400x128xbf16, #tpu.memory_space<vmem>>, %arg6: memref<256x128xbf16, #tpu.memory_space<vmem>>, %arg7: memref<1x128xf32, #tpu.memory_space<vmem>>, %arg8: memref<8x128xbf16, #tpu.memory_space<vmem>>, %arg9: memref<8x1xf32, #tpu.memory_space<vmem>>, %arg10: memref<1x8x400xf32, #tpu.memory_space<vmem>>) attributes {dimension_semantics = [#tpu.dimension_semantics<parallel>], iteration_bounds = array<i64: 2>, scalar_prefetch = 1 : i64, scratch_operands = 0 : i64, tpu.core_type = #tpu.core_type<tc>, window_params = [{transform_indices = @transform_0, window_bounds = array<i64: 1, 128, 128>}, {transform_indices = @transform_1, window_bounds = array<i64: 1, 128, 256>}, {pipeline_mode = #tpu.pipeline_mode<synchronous>, transform_indices = @transform_2, window_bounds = array<i64: 1, 256>}, {pipeline_mode = #tpu.pipeline_mode<synchronous>, transform_indices = @transform_3, window_bounds = array<i64: 400, 128>}, {pipeline_mode = #tpu.pipeline_mode<synchronous>, transform_indices = @transform_4, window_bounds = array<i64: 256, 128>}, {pipeline_mode = #tpu.pipeline_mode<synchronous>, transform_indices = @transform_5, window_bounds = array<i64: 1, 128>}, {pipeline_mode = #tpu.pipeline_mode<synchronous>, transform_indices = @transform_6, window_bounds = array<i64: 8, 128>}, {pipeline_mode = #tpu.pipeline_mode<synchronous>, transform_indices = @transform_7, window_bounds = array<i64: 8, 1>}, {transform_indices = @transform_8, window_bounds = array<i64: 1, 8, 400>}]} {
    %c0 = arith.constant 0 : index
    %c0_0 = arith.constant 0 : index
    %c0_1 = arith.constant 0 : index
    %0 = vector.load %arg2[%c0, %c0_0, %c0_1] : memref<1x128x128xbf16, #tpu.memory_space<vmem>>, vector<1x128x128xbf16>
    %1 = vector.shape_cast %0 : vector<1x128x128xbf16> to vector<128x128xbf16>
    %c0_2 = arith.constant 0 : index
    %c0_3 = arith.constant 0 : index
    %c0_4 = arith.constant 0 : index
    %2 = vector.load %arg3[%c0_2, %c0_3, %c0_4] : memref<1x128x256xbf16, #tpu.memory_space<vmem>>, vector<1x128x256xbf16>
    %3 = vector.shape_cast %2 : vector<1x128x256xbf16> to vector<128x256xbf16>
    %cst = arith.constant dense<0.000000e+00> : vector<128x256xf32>
    %4 = tpu.matmul %1, %3, %cst {dimension_numbers = #tpu.dot_dimension_numbers<[1], [0], [0], [1], [0, 0, 1, 1], [], []>} : vector<128x128xbf16>, vector<128x256xbf16>, vector<128x256xf32> -> vector<128x256xf32>
    %c0_5 = arith.constant 0 : index
    %c0_6 = arith.constant 0 : index
    %5 = vector.load %arg4[%c0_5, %c0_6] : memref<1x256xf32, #tpu.memory_space<vmem>>, vector<1x256xf32>
    %6 = vector.broadcast %5 : vector<1x256xf32> to vector<128x256xf32>
    %7 = arith.addf %4, %6 : vector<128x256xf32>
    %cst_7 = arith.constant 0.000000e+00 : f32
    %8 = vector.broadcast %cst_7 : f32 to vector<128x256xf32>
    %9 = arith.maximumf %7, %8 : vector<128x256xf32>
    %10 = arith.truncf %9 : vector<128x256xf32> to vector<128x256xbf16>
    %c0_8 = arith.constant 0 : index
    %c0_9 = arith.constant 0 : index
    %11 = vector.load %arg5[%c0_8, %c0_9] : memref<400x128xbf16, #tpu.memory_space<vmem>>, vector<400x128xbf16>
    %cst_10 = arith.constant dense<0.000000e+00> : vector<400x256xf32>
    %12 = tpu.matmul %11, %10, %cst_10 {dimension_numbers = #tpu.dot_dimension_numbers<[1], [0], [0], [1], [0, 0, 1, 1], [], []>} : vector<400x128xbf16>, vector<128x256xbf16>, vector<400x256xf32> -> vector<400x256xf32>
    %13 = arith.truncf %12 : vector<400x256xf32> to vector<400x256xbf16>
    %c0_11 = arith.constant 0 : index
    %c0_12 = arith.constant 0 : index
    %14 = vector.load %arg6[%c0_11, %c0_12] : memref<256x128xbf16, #tpu.memory_space<vmem>>, vector<256x128xbf16>
    %cst_13 = arith.constant dense<0.000000e+00> : vector<400x128xf32>
    %15 = tpu.matmul %13, %14, %cst_13 {dimension_numbers = #tpu.dot_dimension_numbers<[1], [0], [0], [1], [0, 0, 1, 1], [], []>} : vector<400x256xbf16>, vector<256x128xbf16>, vector<400x128xf32> -> vector<400x128xf32>
    %c0_14 = arith.constant 0 : index
    %c0_15 = arith.constant 0 : index
    %16 = vector.load %arg7[%c0_14, %c0_15] : memref<1x128xf32, #tpu.memory_space<vmem>>, vector<1x128xf32>
    %17 = vector.broadcast %16 : vector<1x128xf32> to vector<400x128xf32>
    %18 = arith.addf %15, %17 : vector<400x128xf32>
    %cst_16 = arith.constant 0.000000e+00 : f32
    %19 = vector.broadcast %cst_16 : f32 to vector<400x128xf32>
    %20 = arith.maximumf %18, %19 : vector<400x128xf32>
    %21 = arith.truncf %20 : vector<400x128xf32> to vector<400x128xbf16>
    %c0_17 = arith.constant 0 : index
    %c0_18 = arith.constant 0 : index
    %22 = vector.load %arg8[%c0_17, %c0_18] : memref<8x128xbf16, #tpu.memory_space<vmem>>, vector<8x128xbf16>
    %cst_19 = arith.constant dense<0.000000e+00> : vector<8x400xf32>
    %23 = tpu.matmul %22, %21, %cst_19 {dimension_numbers = #tpu.dot_dimension_numbers<[1], [1], [0], [0], [0, 0, 1, 0], [], []>} : vector<8x128xbf16>, vector<400x128xbf16>, vector<8x400xf32> -> vector<8x400xf32>
    %c0_20 = arith.constant 0 : index
    %c0_21 = arith.constant 0 : index
    %24 = vector.load %arg9[%c0_20, %c0_21] : memref<8x1xf32, #tpu.memory_space<vmem>>, vector<8x1xf32>
    %25 = vector.broadcast %24 : vector<8x1xf32> to vector<8x400xf32>
    %26 = arith.addf %23, %25 : vector<8x400xf32>
    %27 = vector.shape_cast %26 : vector<8x400xf32> to vector<1x8x400xf32>
    %c0_22 = arith.constant 0 : index
    %c0_23 = arith.constant 0 : index
    %c0_24 = arith.constant 0 : index
    %28 = vector.load %arg10[%c0_22, %c0_23, %c0_24] : memref<1x8x400xf32, #tpu.memory_space<vmem>>, vector<1x8x400xf32>
    tpu.vector_store %arg10[%c0_22, %c0_23, %c0_24], %27 {strides = array<i32>} : memref<1x8x400xf32, #tpu.memory_space<vmem>>, vector<1x8x400xf32>,
    return
  }
  func.func @transform_0(%arg0: i32, %arg1: memref<2xi32, #tpu.memory_space<smem>>) -> (i32, i32, i32) {
    %c0_i32 = arith.constant 0 : i32
    %c0_i32_0 = arith.constant 0 : i32
    %c0_i32_1 = arith.constant 0 : i32
    return %arg0, %c0_i32, %c0_i32_0 : i32, i32, i32
  }
  func.func @transform_1(%arg0: i32, %arg1: memref<2xi32, #tpu.memory_space<smem>>) -> (i32, i32, i32) {
    %0 = arith.index_cast %arg0 : i32 to index
    %1 = memref.load %arg1[%0] : memref<2xi32, #tpu.memory_space<smem>>
    %c0_i32 = arith.constant 0 : i32
    %c0_i32_0 = arith.constant 0 : i32
    %c0_i32_1 = arith.constant 0 : i32
    return %1, %c0_i32, %c0_i32_0 : i32, i32, i32
  }
  func.func @transform_2(%arg0: i32, %arg1: memref<2xi32, #tpu.memory_space<smem>>) -> (i32, i32) {
    %c0_i32 = arith.constant 0 : i32
    %c0_i32_0 = arith.constant 0 : i32
    %c0_i32_1 = arith.constant 0 : i32
    return %c0_i32, %c0_i32_0 : i32, i32
  }
  func.func @transform_3(%arg0: i32, %arg1: memref<2xi32, #tpu.memory_space<smem>>) -> (i32, i32) {
    %c0_i32 = arith.constant 0 : i32
    %c0_i32_0 = arith.constant 0 : i32
    %c0_i32_1 = arith.constant 0 : i32
    return %c0_i32, %c0_i32_0 : i32, i32
  }
  func.func @transform_4(%arg0: i32, %arg1: memref<2xi32, #tpu.memory_space<smem>>) -> (i32, i32) {
    %c0_i32 = arith.constant 0 : i32
    %c0_i32_0 = arith.constant 0 : i32
    %c0_i32_1 = arith.constant 0 : i32
    return %c0_i32, %c0_i32_0 : i32, i32
  }
  func.func @transform_5(%arg0: i32, %arg1: memref<2xi32, #tpu.memory_space<smem>>) -> (i32, i32) {
    %c0_i32 = arith.constant 0 : i32
    %c0_i32_0 = arith.constant 0 : i32
    %c0_i32_1 = arith.constant 0 : i32
    return %c0_i32, %c0_i32_0 : i32, i32
  }
  func.func @transform_6(%arg0: i32, %arg1: memref<2xi32, #tpu.memory_space<smem>>) -> (i32, i32) {
    %c0_i32 = arith.constant 0 : i32
    %c0_i32_0 = arith.constant 0 : i32
    %c0_i32_1 = arith.constant 0 : i32
    return %c0_i32, %c0_i32_0 : i32, i32
  }
  func.func @transform_7(%arg0: i32, %arg1: memref<2xi32, #tpu.memory_space<smem>>) -> (i32, i32) {
    %c0_i32 = arith.constant 0 : i32
    %c0_i32_0 = arith.constant 0 : i32
    %c0_i32_1 = arith.constant 0 : i32
    return %c0_i32, %c0_i32_0 : i32, i32
  }
  func.func @transform_8(%arg0: i32, %arg1: memref<2xi32, #tpu.memory_space<smem>>) -> (i32, i32, i32) {
    %c0_i32 = arith.constant 0 : i32
    %c0_i32_0 = arith.constant 0 : i32
    %c0_i32_1 = arith.constant 0 : i32
    return %arg0, %c0_i32, %c0_i32_0 : i32, i32, i32
  }
}

</mosaic_0001>

<llo_original>
// kernel: scale_forward.1
$region0: #{scale_forward.1}
  #allocation0 [shape = 'u32[]', space=smem, size = 0x4, offset = 0x4, fixed_abs, tag = 'smem constant byte address 0x4 - core index']
  #allocation1 [shape = 'u32[144,128]{1,0:T(1,128)}', space=vmem, size = 0x12000, scoped, tag = 'internal scratch']
  #allocation2 [shape = 's32[1]{0}', space=sflag, size = 0x4, scoped, tag = 'scoped memory for scale_forward.1']
  #allocation3 [shape = 'u8[512]{0}', space=smem, size = 0x200, scoped, tag = 'prefetched SMEM operand 0']
  %s0 = inlined_call_operand.vmem [shape: s32[2], index: 0, kind: input, shape index: {}]
  %s1 = inlined_call_operand.vmem [shape: bf16[2,128,128], index: 1, kind: input, shape index: {}]
  %s2 = inlined_call_operand.vmem [shape: bf16[2,128,256], index: 2, kind: input, shape index: {}]
  %s3 = inlined_call_operand.vmem [shape: f32[1,256], index: 3, kind: input, shape index: {}]
  %s4 = inlined_call_operand.vmem [shape: bf16[400,128], index: 4, kind: input, shape index: {}]
  %s5 = inlined_call_operand.vmem [shape: bf16[256,128], index: 5, kind: input, shape index: {}]
  %s6 = inlined_call_operand.vmem [shape: f32[1,128], index: 6, kind: input, shape index: {}]
  %s7 = inlined_call_operand.vmem [shape: bf16[8,128], index: 7, kind: input, shape index: {}]
  %s8 = inlined_call_operand.vmem [shape: f32[8,1], index: 8, kind: input, shape index: {}]
  %s9 = inlined_call_operand.vmem [shape: f32[2,8,400], index: 9, kind: output, shape index: {}]
  %s10 = sld [smem:[#allocation0]]
  $region65: #{scale_forward.1} parent=0
    _
  %s12 = ssub.s32 1, %s10
  %s13 = scalar_select 0, %s12, %s10
  %s14 = sshll.u32 %s0, 4
  %s15 = int_to_ptr.vmem [resolvable:$true] %s14
  %17 = dma.vmem_to_smem %s15, 16, [#allocation3], [#allocation2]
  %18 = dma.done [#allocation2], 16
  %19 = sfence
  loop: start=0, step=1, limit=4
  $region2: #{scale_forward.1} parent=0 // loop_pre_header
    _
  $region3: #{scale_forward.1} parent=0 // loop_header
    %s21 = sphi 0, %s25
    %p22 = scmp.ge.s32.totalorder %s21, 4
    %s31 = sphi 0, %s33
    %s34 = sphi 0, %s31
    %s35 = sphi 0, %s34
    %s51 = sphi 0, %s35
    %s59 = sphi 0, %s61
    %s62 = sphi 0, %s59
    %s63 = sphi 0, %s62
    %s79 = sphi 0, %s63
    %s83 = sphi 0, %s83
    %s85 = sphi 0, %s83
    %s86 = sphi 0, %s85
    %s100 = sphi 0, %s86
    %s104 = sphi 0, %s104
    %s106 = sphi 0, %s104
    %s107 = sphi 0, %s106
    %s121 = sphi 0, %s107
    %s125 = sphi 0, %s125
    %s127 = sphi 0, %s125
    %s128 = sphi 0, %s127
    %s142 = sphi 0, %s128
    %s146 = sphi 0, %s146
    %s148 = sphi 0, %s146
    %s149 = sphi 0, %s148
    %s163 = sphi 0, %s149
    %s167 = sphi 0, %s167
    %s169 = sphi 0, %s167
    %s170 = sphi 0, %s169
    %s184 = sphi 0, %s170
    %s188 = sphi 0, %s188
    %s190 = sphi 0, %s188
    %s191 = sphi 0, %s190
    %s205 = sphi 0, %s191
    %s211 = sphi 0, %s213
    %s214 = sphi 0, %s211
    %s215 = sphi 0, %s214
    %s231 = sphi 0, %s215
  $region4: #{scale_forward.1} parent=0 // loop_header_branch
    %24 = sbr.rel (%p22) target = $region8
  $region5: #{scale_forward.1} parent=0 // loop_body
    %s26 = ssub.s32 %s21, 1
    %s27 = ssub.s32 %s21, 2
    %s28 = sadd.s32 %s21, 1
    %s29 = ssub.s32 %s21, %s28
    %p30 = scmp.eq.s32.totalorder %s29, 0
    %s32 = sadd.s32 %s31, 1
    %s33 = scalar_select %p30, %s31, %s32
    %p36 = pneg %p30
    %p37 = scmp.eq.s32.totalorder %s21, 1
    %p38 = por %p36, %p37
    %p39 = scmp.ne.s32.totalorder %s31, %s34
    %p40 = scmp.eq.s32.totalorder %s21, 0
    %p41 = por %p39, %p40
    %p42 = scmp.ne.s32.totalorder %s31, %s34
    %p43 = scmp.eq.s32.totalorder %s26, 1
    %p44 = por %p42, %p43
    %p45 = scmp.ne.s32.totalorder %s34, %s35
    %p46 = scmp.eq.s32.totalorder %s26, 0
    %p47 = por %p45, %p46
    %p48 = scmp.ne.s32.totalorder %s34, %s35
    %p49 = scmp.eq.s32.totalorder %s27, 1
    %p50 = por %p48, %p49
    %p52 = scmp.ne.s32.totalorder %s35, %s51
    %p53 = scmp.eq.s32.totalorder %s27, 0
    %p54 = por %p52, %p53
    %s55 = sld [smem:[#allocation3 + %s21]]
    %s56 = sld [smem:[#allocation3 + %s28]]
    %s57 = ssub.s32 %s55, %s56
    %p58 = scmp.eq.s32.totalorder %s57, 0
    %s60 = sadd.s32 %s59, 1
    %s61 = scalar_select %p58, %s59, %s60
    %p64 = pneg %p58
    %p65 = scmp.eq.s32.totalorder %s21, 1
    %p66 = por %p64, %p65
    %p67 = scmp.ne.s32.totalorder %s59, %s62
    %p68 = scmp.eq.s32.totalorder %s21, 0
    %p69 = por %p67, %p68
    %p70 = scmp.ne.s32.totalorder %s59, %s62
    %p71 = scmp.eq.s32.totalorder %s26, 1
    %p72 = por %p70, %p71
    %p73 = scmp.ne.s32.totalorder %s62, %s63
    %p74 = scmp.eq.s32.totalorder %s26, 0
    %p75 = por %p73, %p74
    %p76 = scmp.ne.s32.totalorder %s62, %s63
    %p77 = scmp.eq.s32.totalorder %s27, 1
    %p78 = por %p76, %p77
    %p80 = scmp.ne.s32.totalorder %s63, %s79
    %p81 = scmp.eq.s32.totalorder %s27, 0
    %p82 = por %p80, %p81
    %s84 = sadd.s32 %s83, 1
    %p87 = scmp.eq.s32.totalorder %s21, 1
    %p88 = scmp.ne.s32.totalorder %s83, %s85
    %p89 = scmp.eq.s32.totalorder %s21, 0
    %p90 = por %p88, %p89
    %p91 = scmp.ne.s32.totalorder %s83, %s85
    %p92 = scmp.eq.s32.totalorder %s26, 1
    %p93 = por %p91, %p92
    %p94 = scmp.ne.s32.totalorder %s85, %s86
    %p95 = scmp.eq.s32.totalorder %s26, 0
    %p96 = por %p94, %p95
    %p97 = scmp.ne.s32.totalorder %s85, %s86
    %p98 = scmp.eq.s32.totalorder %s27, 1
    %p99 = por %p97, %p98
    %p101 = scmp.ne.s32.totalorder %s86, %s100
    %p102 = scmp.eq.s32.totalorder %s27, 0
    %p103 = por %p101, %p102
    %s105 = sadd.s32 %s104, 1
    %p108 = scmp.eq.s32.totalorder %s21, 1
    %p109 = scmp.ne.s32.totalorder %s104, %s106
    %p110 = scmp.eq.s32.totalorder %s21, 0
    %p111 = por %p109, %p110
    %p112 = scmp.ne.s32.totalorder %s104, %s106
    %p113 = scmp.eq.s32.totalorder %s26, 1
    %p114 = por %p112, %p113
    %p115 = scmp.ne.s32.totalorder %s106, %s107
    %p116 = scmp.eq.s32.totalorder %s26, 0
    %p117 = por %p115, %p116
    %p118 = scmp.ne.s32.totalorder %s106, %s107
    %p119 = scmp.eq.s32.totalorder %s27, 1
    %p120 = por %p118, %p119
    %p122 = scmp.ne.s32.totalorder %s107, %s121
    %p123 = scmp.eq.s32.totalorder %s27, 0
    %p124 = por %p122, %p123
    %s126 = sadd.s32 %s125, 1
    %p129 = scmp.eq.s32.totalorder %s21, 1
    %p130 = scmp.ne.s32.totalorder %s125, %s127
    %p131 = scmp.eq.s32.totalorder %s21, 0
    %p132 = por %p130, %p131
    %p133 = scmp.ne.s32.totalorder %s125, %s127
    %p134 = scmp.eq.s32.totalorder %s26, 1
    %p135 = por %p133, %p134
    %p136 = scmp.ne.s32.totalorder %s127, %s128
    %p137 = scmp.eq.s32.totalorder %s26, 0
    %p138 = por %p136, %p137
    %p139 = scmp.ne.s32.totalorder %s127, %s128
    %p140 = scmp.eq.s32.totalorder %s27, 1
    %p141 = por %p139, %p140
    %p143 = scmp.ne.s32.totalorder %s128, %s142
    %p144 = scmp.eq.s32.totalorder %s27, 0
    %p145 = por %p143, %p144
    %s147 = sadd.s32 %s146, 1
    %p150 = scmp.eq.s32.totalorder %s21, 1
    %p151 = scmp.ne.s32.totalorder %s146, %s148
    %p152 = scmp.eq.s32.totalorder %s21, 0
    %p153 = por %p151, %p152
    %p154 = scmp.ne.s32.totalorder %s146, %s148
    %p155 = scmp.eq.s32.totalorder %s26, 1
    %p156 = por %p154, %p155
    %p157 = scmp.ne.s32.totalorder %s148, %s149
    %p158 = scmp.eq.s32.totalorder %s26, 0
    %p159 = por %p157, %p158
    %p160 = scmp.ne.s32.totalorder %s148, %s149
    %p161 = scmp.eq.s32.totalorder %s27, 1
    %p162 = por %p160, %p161
    %p164 = scmp.ne.s32.totalorder %s149, %s163
    %p165 = scmp.eq.s32.totalorder %s27, 0
    %p166 = por %p164, %p165
    %s168 = sadd.s32 %s167, 1
    %p171 = scmp.eq.s32.totalorder %s21, 1
    %p172 = scmp.ne.s32.totalorder %s167, %s169
    %p173 = scmp.eq.s32.totalorder %s21, 0
    %p174 = por %p172, %p173
    %p175 = scmp.ne.s32.totalorder %s167, %s169
    %p176 = scmp.eq.s32.totalorder %s26, 1
    %p177 = por %p175, %p176
    %p178 = scmp.ne.s32.totalorder %s169, %s170
    %p179 = scmp.eq.s32.totalorder %s26, 0
    %p180 = por %p178, %p179
    %p181 = scmp.ne.s32.totalorder %s169, %s170
    %p182 = scmp.eq.s32.totalorder %s27, 1
    %p183 = por %p181, %p182
    %p185 = scmp.ne.s32.totalorder %s170, %s184
    %p186 = scmp.eq.s32.totalorder %s27, 0
    %p187 = por %p185, %p186
    %s189 = sadd.s32 %s188, 1
    %p192 = scmp.eq.s32.totalorder %s21, 1
    %p193 = scmp.ne.s32.totalorder %s188, %s190
    %p194 = scmp.eq.s32.totalorder %s21, 0
    %p195 = por %p193, %p194
    %p196 = scmp.ne.s32.totalorder %s188, %s190
    %p197 = scmp.eq.s32.totalorder %s26, 1
    %p198 = por %p196, %p197
    %p199 = scmp.ne.s32.totalorder %s190, %s191
    %p200 = scmp.eq.s32.totalorder %s26, 0
    %p201 = por %p199, %p200
    %p202 = scmp.ne.s32.totalorder %s190, %s191
    %p203 = scmp.eq.s32.totalorder %s27, 1
    %p204 = por %p202, %p203
    %p206 = scmp.ne.s32.totalorder %s191, %s205
    %p207 = scmp.eq.s32.totalorder %s27, 0
    %p208 = por %p206, %p207
    %s209 = ssub.s32 %s21, %s28
    %p210 = scmp.eq.s32.totalorder %s209, 0
    %s212 = sadd.s32 %s211, 1
    %s213 = scalar_select %p210, %s211, %s212
    %p216 = pneg %p210
    %p217 = scmp.eq.s32.totalorder %s21, 1
    %p218 = por %p216, %p217
    %p219 = scmp.ne.s32.totalorder %s211, %s214
    %p220 = scmp.eq.s32.totalorder %s21, 0
    %p221 = por %p219, %p220
    %p222 = scmp.ne.s32.totalorder %s211, %s214
    %p223 = scmp.eq.s32.totalorder %s26, 1
    %p224 = por %p222, %p223
    %p225 = scmp.ne.s32.totalorder %s214, %s215
    %p226 = scmp.eq.s32.totalorder %s26, 0
    %p227 = por %p225, %p226
    %p228 = scmp.ne.s32.totalorder %s214, %s215
    %p229 = scmp.eq.s32.totalorder %s27, 1
    %p230 = por %p228, %p229
    %p232 = scmp.ne.s32.totalorder %s215, %s231
    %p233 = scmp.eq.s32.totalorder %s27, 0
    %p234 = por %p232, %p233
    %p235 = scmp.le.s32.totalorder 1, %s21
    %p236 = scmp.lt.s32.totalorder %s21, 3
    %p237 = pnand %p235, %p236
    %p238 = pneg %p237
    // Predicated region
    $region9: #{scale_forward.1} parent=5 // pred_check
      _
    $region10: #{scale_forward.1} parent=5 // pred_check_branch
      %240 = sbr.rel (%p237) target = $region12
    $region11: #{scale_forward.1} parent=5 // pred_region
      %s241 = ssub.s32 %s21, 1
      // Predicated region
      $region13: #{scale_forward.1} parent=11 // pred_check
        %p242 = pneg %p96
      $region14: #{scale_forward.1} parent=11 // pred_check_branch
        %244 = sbr.rel (%p242) target = $region16
      $region15: #{scale_forward.1} parent=11 // pred_region
        _
      $region16: #{scale_forward.1} parent=11 // pred_fallthru
        _
      // Predicated region
      $region17: #{scale_forward.1} parent=11 // pred_check
        %p245 = pneg %p117
      $region18: #{scale_forward.1} parent=11 // pred_check_branch
        %247 = sbr.rel (%p245) target = $region20
      $region19: #{scale_forward.1} parent=11 // pred_region
        _
      $region20: #{scale_forward.1} parent=11 // pred_fallthru
        _
      // Predicated region
      $region21: #{scale_forward.1} parent=11 // pred_check
        %p248 = pneg %p138
      $region22: #{scale_forward.1} parent=11 // pred_check_branch
        %250 = sbr.rel (%p248) target = $region24
      $region23: #{scale_forward.1} parent=11 // pred_region
        _
      $region24: #{scale_forward.1} parent=11 // pred_fallthru
        _
      // Predicated region
      $region25: #{scale_forward.1} parent=11 // pred_check
        %p251 = pneg %p159
      $region26: #{scale_forward.1} parent=11 // pred_check_branch
        %253 = sbr.rel (%p251) target = $region28
      $region27: #{scale_forward.1} parent=11 // pred_region
        _
      $region28: #{scale_forward.1} parent=11 // pred_fallthru
        _
      // Predicated region
      $region29: #{scale_forward.1} parent=11 // pred_check
        %p254 = pneg %p180
      $region30: #{scale_forward.1} parent=11 // pred_check_branch
        %256 = sbr.rel (%p254) target = $region32
      $region31: #{scale_forward.1} parent=11 // pred_region
        _
      $region32: #{scale_forward.1} parent=11 // pred_fallthru
        _
      // Predicated region
      $region33: #{scale_forward.1} parent=11 // pred_check
        %p257 = pneg %p201
      $region34: #{scale_forward.1} parent=11 // pred_check_branch
        %259 = sbr.rel (%p257) target = $region36
      $region35: #{scale_forward.1} parent=11 // pred_region
        _
      $region36: #{scale_forward.1} parent=11 // pred_fallthru
        _
    $region12: #{scale_forward.1} parent=5 // pred_fallthru
      _
    %p260 = scmp.lt.s32.totalorder %s21, 2
    // Predicated region
    $region37: #{scale_forward.1} parent=5 // pred_check
      %p261 = pneg %p260
    $region38: #{scale_forward.1} parent=5 // pred_check_branch
      %263 = sbr.rel (%p261) target = $region40
    $region39: #{scale_forward.1} parent=5 // pred_region
      // Predicated region
      $region41: #{scale_forward.1} parent=39 // pred_check
        %p264 = pneg %p41
      $region42: #{scale_forward.1} parent=39 // pred_check_branch
        %266 = sbr.rel (%p264) target = $region44
      $region43: #{scale_forward.1} parent=39 // pred_region
        %p267 = scmp.lt.s32.totalorder %s21, 1
        %s268 = scalar_select %p267, %s21, 1
        %s269 = smul.addr %s268, 16
        %s270 = smul.addr %s269, 4
        %s271 = scalar_lea.vmem %s1, %s270
      $region44: #{scale_forward.1} parent=39 // pred_fallthru
        _
      // Predicated region
      $region45: #{scale_forward.1} parent=39 // pred_check
        %p272 = pneg %p69
      $region46: #{scale_forward.1} parent=39 // pred_check_branch
        %274 = sbr.rel (%p272) target = $region48
      $region47: #{scale_forward.1} parent=39 // pred_region
        %s275 = sld [smem:[#allocation3 + %s21]]
        %p276 = scmp.lt.s32.totalorder %s275, 1
        %s277 = scalar_select %p276, %s275, 1
        %s278 = smul.addr %s277, 32
        %s279 = smul.addr %s278, 4
        %s280 = scalar_lea.vmem %s2, %s279
        %s281 = sld [smem:[#allocation3 + %s21]]
      $region48: #{scale_forward.1} parent=39 // pred_fallthru
        _
    $region40: #{scale_forward.1} parent=5 // pred_fallthru
      _
    %p282 = scmp.le.s32.totalorder 1, %s21
    %p283 = scmp.lt.s32.totalorder %s21, 3
    %p284 = pnand %p282, %p283
    %p285 = pneg %p284
    // Predicated region
    $region49: #{scale_forward.1} parent=5 // pred_check
      _
    $region50: #{scale_forward.1} parent=5 // pred_check_branch
      %287 = sbr.rel (%p284) target = $region52
    $region51: #{scale_forward.1} parent=5 // pred_region
      %s288 = ssub.s32 %s21, 1
      %p289 = scmp.lt.s32.totalorder %s26, 1
      %s290 = scalar_select %p289, %s26, 1
      %s291 = smul.addr %s290, 16
      %s292 = smul.addr %s291, 4
      %s293 = scalar_lea.vmem %s1, %s292
      %p294 = pneg %p47
      %p295 = pneg %p44
      %s296 = sld [smem:[#allocation3 + %s26]]
      %p297 = scmp.lt.s32.totalorder %s296, 1
      %s298 = scalar_select %p297, %s296, 1
      %s299 = smul.addr %s298, 32
      %s300 = smul.addr %s299, 4
      %s301 = scalar_lea.vmem %s2, %s300
      %p302 = pneg %p75
      %p303 = pneg %p72
      %p304 = pneg %p96
      %p305 = pneg %p93
      %p306 = pneg %p117
      %p307 = pneg %p114
      %p308 = pneg %p138
      %p309 = pneg %p135
      %p310 = pneg %p159
      %p311 = pneg %p156
      %p312 = pneg %p180
      %p313 = pneg %p177
      %p314 = pneg %p201
      %p315 = pneg %p198
      %p316 = pneg %p227
      %p317 = pneg %p224
      %p318 = scmp.lt.s32.totalorder %s26, 1
      %s319 = scalar_select %p318, %s26, 1
      %s320 = smul.addr %s319, 4
      %s321 = smul.addr %s320, 8
      %s322 = scalar_lea.vmem %s9, %s321
      %p323 = scmp.lt.s32.totalorder %s26, 1
      %s324 = scalar_select %p323, %s26, 1
      %s325 = smul.addr %s324, 16
      %s326 = smul.addr %s325, 4
      %s327 = scalar_lea.vmem %s1, %s326
      %s328 = sld [smem:[#allocation3 + %s26]]
      %p329 = scmp.lt.s32.totalorder %s328, 1
      %s330 = scalar_select %p329, %s328, 1
      %s331 = smul.addr %s330, 32
      %s332 = smul.addr %s331, 4
      %s333 = scalar_lea.vmem %s2, %s332
      %s334 = sld [smem:[#allocation3 + %s26]]
      %p335 = scmp.lt.s32.totalorder %s26, 1
      %s336 = scalar_select %p335, %s26, 1
      %s337 = smul.addr %s336, 4
      %s338 = smul.addr %s337, 8
      %s339 = scalar_lea.vmem %s9, %s338
      %v341 = vld [vmem:[%s327] sm:$0xf]
      %v342 = vld [vmem:[%s327 + $0x4] sm:$0xf]
      %v343 = vld [vmem:[%s327 + $0x8] sm:$0xf]
      %v344 = vld [vmem:[%s327 + $0xc] sm:$0xf]
      %v345 = vld [vmem:[%s327 + $0x10] sm:$0xf]
      %v346 = vld [vmem:[%s327 + $0x14] sm:$0xf]
      %v347 = vld [vmem:[%s327 + $0x18] sm:$0xf]
      %v348 = vld [vmem:[%s327 + $0x1c] sm:$0xf]
      %v349 = vld [vmem:[%s327 + $0x20] sm:$0xf]
      %v350 = vld [vmem:[%s327 + $0x24] sm:$0xf]
      %v351 = vld [vmem:[%s327 + $0x28] sm:$0xf]
      %v352 = vld [vmem:[%s327 + $0x2c] sm:$0xf]
      %v353 = vld [vmem:[%s327 + $0x30] sm:$0xf]
      %v354 = vld [vmem:[%s327 + $0x34] sm:$0xf]
      %v355 = vld [vmem:[%s327 + $0x38] sm:$0xf]
      %v356 = vld [vmem:[%s327 + $0x3c] sm:$0xf]
      %v357 = vld [vmem:[%s333] sm:$0xff]
      %v358 = vld [vmem:[%s333 + $0x8] sm:$0xff]
      %v359 = vld [vmem:[%s333 + $0x10] sm:$0xff]
      %v360 = vld [vmem:[%s333 + $0x18] sm:$0xff]
      %v361 = vld [vmem:[%s333 + $0x20] sm:$0xff]
      %v362 = vld [vmem:[%s333 + $0x28] sm:$0xff]
      %v363 = vld [vmem:[%s333 + $0x30] sm:$0xff]
      %v364 = vld [vmem:[%s333 + $0x38] sm:$0xff]
      %v365 = vld [vmem:[%s333 + $0x40] sm:$0xff]
      %v366 = vld [vmem:[%s333 + $0x48] sm:$0xff]
      %v367 = vld [vmem:[%s333 + $0x50] sm:$0xff]
      %v368 = vld [vmem:[%s333 + $0x58] sm:$0xff]
      %v369 = vld [vmem:[%s333 + $0x60] sm:$0xff]
      %v370 = vld [vmem:[%s333 + $0x68] sm:$0xff]
      %v371 = vld [vmem:[%s333 + $0x70] sm:$0xff]
      %v372 = vld [vmem:[%s333 + $0x78] sm:$0xff]
      %v373 = vld [vmem:[%s3] sm:$0x3]
      %v375 = vlaneseq
      %v376 = vshrl.u32 %v375, 7
      %v377 = vsub.s32 0, %v376
      %v378 = vrot.slane %v373, %v377
      %v379 = vlaneseq
      %v380 = vshrl.u32 %v379, 7
      %v381 = vsub.s32 1, %v380
      %v382 = vrot.slane %v373, %v381
      %v401 = vunpack.c.l.b16 %v341
      %v402 = vunpack.c.l.b16 %v342
      %v403 = vunpack.c.l.b16 %v343
      %v404 = vunpack.c.l.b16 %v344
      %v405 = vunpack.c.l.b16 %v345
      %v406 = vunpack.c.l.b16 %v346
      %v407 = vunpack.c.l.b16 %v347
      %v408 = vunpack.c.l.b16 %v348
      %v409 = vunpack.c.l.b16 %v349
      %v410 = vunpack.c.l.b16 %v350
      %v411 = vunpack.c.l.b16 %v351
      %v412 = vunpack.c.l.b16 %v352
      %v413 = vunpack.c.l.b16 %v353
      %v414 = vunpack.c.l.b16 %v354
      %v415 = vunpack.c.l.b16 %v355
      %v416 = vunpack.c.l.b16 %v356
      %v417 = vpack.c.b16 %v402, %v401
      %v418 = vpack.c.b16 %v404, %v403
      %v419 = vpack.c.b16 %v406, %v405
      %v420 = vpack.c.b16 %v408, %v407
      %v421 = vpack.c.b16 %v410, %v409
      %v422 = vpack.c.b16 %v412, %v411
      %v423 = vpack.c.b16 %v414, %v413
      %v424 = vpack.c.b16 %v416, %v415
      %v449 = vunpack.c.l.b16 %v357
      %v450 = vunpack.c.h.b16 %v357
      %v451 = vunpack.c.l.b16 %v358
      %v452 = vunpack.c.h.b16 %v358
      %v453 = vunpack.c.l.b16 %v359
      %v454 = vunpack.c.h.b16 %v359
      %v455 = vunpack.c.l.b16 %v360
      %v456 = vunpack.c.h.b16 %v360
      %v457 = vunpack.c.l.b16 %v361
      %v458 = vunpack.c.h.b16 %v361
      %v459 = vunpack.c.l.b16 %v362
      %v460 = vunpack.c.h.b16 %v362
      %v461 = vunpack.c.l.b16 %v363
      %v462 = vunpack.c.h.b16 %v363
      %v463 = vunpack.c.l.b16 %v364
      %v464 = vunpack.c.h.b16 %v364
      %v465 = vunpack.c.l.b16 %v365
      %v466 = vunpack.c.h.b16 %v365
      %v467 = vunpack.c.l.b16 %v366
      %v468 = vunpack.c.h.b16 %v366
      %v469 = vunpack.c.l.b16 %v367
      %v470 = vunpack.c.h.b16 %v367
      %v471 = vunpack.c.l.b16 %v368
      %v472 = vunpack.c.h.b16 %v368
      %v473 = vunpack.c.l.b16 %v369
      %v474 = vunpack.c.h.b16 %v369
      %v475 = vunpack.c.l.b16 %v370
      %v476 = vunpack.c.h.b16 %v370
      %v477 = vunpack.c.l.b16 %v371
      %v478 = vunpack.c.h.b16 %v371
      %v479 = vunpack.c.l.b16 %v372
      %v480 = vunpack.c.h.b16 %v372
      %v481 = vpack.c.b16 %v451, %v449
      %v482 = vpack.c.b16 %v452, %v450
      %v483 = vpack.c.b16 %v455, %v453
      %v484 = vpack.c.b16 %v456, %v454
      %v485 = vpack.c.b16 %v459, %v457
      %v486 = vpack.c.b16 %v460, %v458
      %v487 = vpack.c.b16 %v463, %v461
      %v488 = vpack.c.b16 %v464, %v462
      %v489 = vpack.c.b16 %v467, %v465
      %v490 = vpack.c.b16 %v468, %v466
      %v491 = vpack.c.b16 %v471, %v469
      %v492 = vpack.c.b16 %v472, %v470
      %v493 = vpack.c.b16 %v475, %v473
      %v494 = vpack.c.b16 %v476, %v474
      %v495 = vpack.c.b16 %v479, %v477
      %v496 = vpack.c.b16 %v480, %v478
      %513 = vmatprep.subr.bf16.mxu0 %v496
      %514 = vmatpush1.bf16.msra.mxu0 %v495
      %515 = vmatprep.subr.bf16.mxu0 %v494
      %516 = vmatpush1.bf16.msra.mxu0 %v493
      %517 = vmatprep.subr.bf16.mxu0 %v492
      %518 = vmatpush1.bf16.msra.mxu0 %v491
      %519 = vmatprep.subr.bf16.mxu0 %v490
      %520 = vmatpush1.bf16.msra.mxu0 %v489
      %521 = vmatprep.subr.bf16.mxu0 %v488
      %522 = vmatpush1.bf16.msra.mxu0 %v487
      %523 = vmatprep.subr.bf16.mxu0 %v486
      %524 = vmatpush1.bf16.msra.mxu0 %v485
      %525 = vmatprep.subr.bf16.mxu0 %v484
      %526 = vmatpush1.bf16.msra.mxu0 %v483
      %527 = vmatprep.subr.bf16.mxu0 %v482
      %528 = vmatpush1.bf16.msra.mxu0 %v481
      %529 = vmatprep.subr.bf16.mxu0 0
      %530 = vmatpush2.bf16.msra.mxu0 0
      %531 = vmatprep.subr.bf16.mxu0 0
      %532 = vmatpush2.bf16.msra.mxu0 0
      %533 = vmatprep.subr.bf16.mxu0 0
      %534 = vmatpush2.bf16.msra.mxu0 0
      %535 = vmatprep.subr.bf16.mxu0 0
      %536 = vmatpush2.bf16.msra.mxu0 0
      %537 = vmatprep.subr.bf16.mxu0 0
      %538 = vmatpush2.bf16.msra.mxu0 0
      %539 = vmatprep.subr.bf16.mxu0 0
      %540 = vmatpush2.bf16.msra.mxu0 0
      %541 = vmatprep.subr.bf16.mxu0 0
      %542 = vmatpush2.bf16.msra.mxu0 0
      %543 = vmatprep.subr.bf16.mxu0 0
      %544 = vmatpush2.bf16.msra.mxu0 0
      %545 = vmatprep.mubr.bf16.mxu0 0
      %546 = vmatmul.mubr.bf16.gmra.mxu0 %v417
      %v547 = vpop.f32.mrf.mxu0
      %v548 = vadd.f32 %v378, %v547
      %v549 = vpop.f32.mrf.mxu0
      %v550 = vadd.f32 %v382, %v549
      %v551 = vpop.f32.mrf.mxu0
      %v552 = vadd.f32 %v378, %v551
      %v553 = vpop.f32.mrf.mxu0
      %v554 = vadd.f32 %v382, %v553
      %555 = vmatprep.mubr.bf16.mxu0 0
      %556 = vmatmul.mubr.bf16.gmra.mxu0 %v418
      %v557 = vpop.f32.mrf.mxu0
      %v558 = vadd.f32 %v378, %v557
      %v559 = vpop.f32.mrf.mxu0
      %v560 = vadd.f32 %v382, %v559
      %v561 = vpop.f32.mrf.mxu0
      %v562 = vadd.f32 %v378, %v561
      %v563 = vpop.f32.mrf.mxu0
      %v564 = vadd.f32 %v382, %v563
      %565 = vmatprep.mubr.bf16.mxu0 0
      %566 = vmatmul.mubr.bf16.gmra.mxu0 %v419
      %v567 = vpop.f32.mrf.mxu0
      %v568 = vadd.f32 %v378, %v567
      %v569 = vpop.f32.mrf.mxu0
      %v570 = vadd.f32 %v382, %v569
      %v571 = vpop.f32.mrf.mxu0
      %v572 = vadd.f32 %v378, %v571
      %v573 = vpop.f32.mrf.mxu0
      %v574 = vadd.f32 %v382, %v573
      %575 = vmatprep.mubr.bf16.mxu0 0
      %576 = vmatmul.mubr.bf16.gmra.mxu0 %v420
      %v577 = vpop.f32.mrf.mxu0
      %v578 = vadd.f32 %v378, %v577
      %v579 = vpop.f32.mrf.mxu0
      %v580 = vadd.f32 %v382, %v579
      %v581 = vpop.f32.mrf.mxu0
      %v582 = vadd.f32 %v378, %v581
      %v583 = vpop.f32.mrf.mxu0
      %v584 = vadd.f32 %v382, %v583
      %585 = vmatprep.mubr.bf16.mxu0 0
      %586 = vmatmul.mubr.bf16.gmra.mxu0 %v421
      %v587 = vpop.f32.mrf.mxu0
      %v588 = vadd.f32 %v378, %v587
      %v589 = vpop.f32.mrf.mxu0
      %v590 = vadd.f32 %v382, %v589
      %v591 = vpop.f32.mrf.mxu0
      %v592 = vadd.f32 %v378, %v591
      %v593 = vpop.f32.mrf.mxu0
      %v594 = vadd.f32 %v382, %v593
      %595 = vmatprep.mubr.bf16.mxu0 0
      %596 = vmatmul.mubr.bf16.gmra.mxu0 %v422
      %v597 = vpop.f32.mrf.mxu0
      %v598 = vadd.f32 %v378, %v597
      %v599 = vpop.f32.mrf.mxu0
      %v600 = vadd.f32 %v382, %v599
      %v601 = vpop.f32.mrf.mxu0
      %v602 = vadd.f32 %v378, %v601
      %v603 = vpop.f32.mrf.mxu0
      %v604 = vadd.f32 %v382, %v603
      %605 = vmatprep.mubr.bf16.mxu0 0
      %606 = vmatmul.mubr.bf16.gmra.mxu0 %v423
      %v607 = vpop.f32.mrf.mxu0
      %v608 = vadd.f32 %v378, %v607
      %v609 = vpop.f32.mrf.mxu0
      %v610 = vadd.f32 %v382, %v609
      %v611 = vpop.f32.mrf.mxu0
      %v612 = vadd.f32 %v378, %v611
      %v613 = vpop.f32.mrf.mxu0
      %v614 = vadd.f32 %v382, %v613
      %615 = vmatprep.mubr.bf16.mxu0 0
      %616 = vmatmul.mubr.bf16.gmra.mxu0 %v424
      %v617 = vpop.f32.mrf.mxu0
      %v618 = vadd.f32 %v378, %v617
      %v619 = vpop.f32.mrf.mxu0
      %v620 = vadd.f32 %v382, %v619
      %v621 = vpop.f32.mrf.mxu0
      %v622 = vadd.f32 %v378, %v621
      %v623 = vpop.f32.mrf.mxu0
      %v624 = vadd.f32 %v382, %v623
      %625 = vdwg.mxu0
      %v626 = vmax.f32 %v548, 0.0
      %v627 = vmax.f32 %v550, 0.0
      %v628 = vmax.f32 %v552, 0.0
      %v629 = vmax.f32 %v554, 0.0
      %v630 = vmax.f32 %v558, 0.0
      %v631 = vmax.f32 %v560, 0.0
      %v632 = vmax.f32 %v562, 0.0
      %v633 = vmax.f32 %v564, 0.0
      %v634 = vmax.f32 %v568, 0.0
      %v635 = vmax.f32 %v570, 0.0
      %v636 = vmax.f32 %v572, 0.0
      %v637 = vmax.f32 %v574, 0.0
      %v638 = vmax.f32 %v578, 0.0
      %v639 = vmax.f32 %v580, 0.0
      %v640 = vmax.f32 %v582, 0.0
      %v641 = vmax.f32 %v584, 0.0
      %v642 = vmax.f32 %v588, 0.0
      %v643 = vmax.f32 %v590, 0.0
      %v644 = vmax.f32 %v592, 0.0
      %v645 = vmax.f32 %v594, 0.0
      %v646 = vmax.f32 %v598, 0.0
      %v647 = vmax.f32 %v600, 0.0
      %v648 = vmax.f32 %v602, 0.0
      %v649 = vmax.f32 %v604, 0.0
      %v650 = vmax.f32 %v608, 0.0
      %v651 = vmax.f32 %v610, 0.0
      %v652 = vmax.f32 %v612, 0.0
      %v653 = vmax.f32 %v614, 0.0
      %v654 = vmax.f32 %v618, 0.0
      %v655 = vmax.f32 %v620, 0.0
      %v656 = vmax.f32 %v622, 0.0
      %v657 = vmax.f32 %v624, 0.0
      %v658 = vpack.c.bf16 %v628, %v626
      %v659 = vpack.c.bf16 %v629, %v627
      %v660 = vpack.c.bf16 %v632, %v630
      %v661 = vpack.c.bf16 %v633, %v631
      %v662 = vpack.c.bf16 %v636, %v634
      %v663 = vpack.c.bf16 %v637, %v635
      %v664 = vpack.c.bf16 %v640, %v638
      %v665 = vpack.c.bf16 %v641, %v639
      %v666 = vpack.c.bf16 %v644, %v642
      %v667 = vpack.c.bf16 %v645, %v643
      %v668 = vpack.c.bf16 %v648, %v646
      %v669 = vpack.c.bf16 %v649, %v647
      %v670 = vpack.c.bf16 %v652, %v650
      %v671 = vpack.c.bf16 %v653, %v651
      %v672 = vpack.c.bf16 %v656, %v654
      %v673 = vpack.c.bf16 %v657, %v655
      %v674 = vld [vmem:[%s4] sm:$0xf]
      %v675 = vld [vmem:[%s4 + $0x4] sm:$0xf]
      %v676 = vld [vmem:[%s4 + $0x8] sm:$0xf]
      %v677 = vld [vmem:[%s4 + $0xc] sm:$0xf]
      %v678 = vld [vmem:[%s4 + $0x10] sm:$0xf]
      %v679 = vld [vmem:[%s4 + $0x14] sm:$0xf]
      %v680 = vld [vmem:[%s4 + $0x18] sm:$0xf]
      %v681 = vld [vmem:[%s4 + $0x1c] sm:$0xf]
      %v682 = vld [vmem:[%s4 + $0x20] sm:$0xf]
      %v683 = vld [vmem:[%s4 + $0x24] sm:$0xf]
      %v684 = vld [vmem:[%s4 + $0x28] sm:$0xf]
      %v685 = vld [vmem:[%s4 + $0x2c] sm:$0xf]
      %v686 = vld [vmem:[%s4 + $0x30] sm:$0xf]
      %v687 = vld [vmem:[%s4 + $0x34] sm:$0xf]
      %v688 = vld [vmem:[%s4 + $0x38] sm:$0xf]
      %v689 = vld [vmem:[%s4 + $0x3c] sm:$0xf]
      %v690 = vld [vmem:[%s4 + $0x40] sm:$0xf]
      %v691 = vld [vmem:[%s4 + $0x44] sm:$0xf]
      %v692 = vld [vmem:[%s4 + $0x48] sm:$0xf]
      %v693 = vld [vmem:[%s4 + $0x4c] sm:$0xf]
      %v694 = vld [vmem:[%s4 + $0x50] sm:$0xf]
      %v695 = vld [vmem:[%s4 + $0x54] sm:$0xf]
      %v696 = vld [vmem:[%s4 + $0x58] sm:$0xf]
      %v697 = vld [vmem:[%s4 + $0x5c] sm:$0xf]
      %v698 = vld [vmem:[%s4 + $0x60] sm:$0xf]
      %v699 = vld [vmem:[%s4 + $0x64] sm:$0xf]
      %v700 = vld [vmem:[%s4 + $0x68] sm:$0xf]
      %v701 = vld [vmem:[%s4 + $0x6c] sm:$0xf]
      %v702 = vld [vmem:[%s4 + $0x70] sm:$0xf]
      %v703 = vld [vmem:[%s4 + $0x74] sm:$0xf]
      %v704 = vld [vmem:[%s4 + $0x78] sm:$0xf]
      %v705 = vld [vmem:[%s4 + $0x7c] sm:$0xf]
      %v706 = vld [vmem:[%s4 + $0x80] sm:$0xf]
      %v707 = vld [vmem:[%s4 + $0x84] sm:$0xf]
      %v708 = vld [vmem:[%s4 + $0x88] sm:$0xf]
      %v709 = vld [vmem:[%s4 + $0x8c] sm:$0xf]
      %v710 = vld [vmem:[%s4 + $0x90] sm:$0xf]
      %v711 = vld [vmem:[%s4 + $0x94] sm:$0xf]
      %v712 = vld [vmem:[%s4 + $0x98] sm:$0xf]
      %v713 = vld [vmem:[%s4 + $0x9c] sm:$0xf]
      %v714 = vld [vmem:[%s4 + $0xa0] sm:$0xf]
      %v715 = vld [vmem:[%s4 + $0xa4] sm:$0xf]
      %v716 = vld [vmem:[%s4 + $0xa8] sm:$0xf]
      %v717 = vld [vmem:[%s4 + $0xac] sm:$0xf]
      %v718 = vld [vmem:[%s4 + $0xb0] sm:$0xf]
      %v719 = vld [vmem:[%s4 + $0xb4] sm:$0xf]
      %v720 = vld [vmem:[%s4 + $0xb8] sm:$0xf]
      %v721 = vld [vmem:[%s4 + $0xbc] sm:$0xf]
      %v722 = vld [vmem:[%s4 + $0xc0] sm:$0xf]
      %v723 = vld [vmem:[%s4 + $0xc4] sm:$0xf]
      %v774 = vunpack.c.l.b16 %v674
      %v775 = vunpack.c.l.b16 %v675
      %v776 = vunpack.c.l.b16 %v676
      %v777 = vunpack.c.l.b16 %v677
      %v778 = vunpack.c.l.b16 %v678
      %v779 = vunpack.c.l.b16 %v679
      %v780 = vunpack.c.l.b16 %v680
      %v781 = vunpack.c.l.b16 %v681
      %v782 = vunpack.c.l.b16 %v682
      %v783 = vunpack.c.l.b16 %v683
      %v784 = vunpack.c.l.b16 %v684
      %v785 = vunpack.c.l.b16 %v685
      %v786 = vunpack.c.l.b16 %v686
      %v787 = vunpack.c.l.b16 %v687
      %v788 = vunpack.c.l.b16 %v688
      %v789 = vunpack.c.l.b16 %v689
      %v790 = vunpack.c.l.b16 %v690
      %v791 = vunpack.c.l.b16 %v691
      %v792 = vunpack.c.l.b16 %v692
      %v793 = vunpack.c.l.b16 %v693
      %v794 = vunpack.c.l.b16 %v694
      %v795 = vunpack.c.l.b16 %v695
      %v796 = vunpack.c.l.b16 %v696
      %v797 = vunpack.c.l.b16 %v697
      %v798 = vunpack.c.l.b16 %v698
      %v799 = vunpack.c.l.b16 %v699
      %v800 = vunpack.c.l.b16 %v700
      %v801 = vunpack.c.l.b16 %v701
      %v802 = vunpack.c.l.b16 %v702
      %v803 = vunpack.c.l.b16 %v703
      %v804 = vunpack.c.l.b16 %v704
      %v805 = vunpack.c.l.b16 %v705
      %v806 = vunpack.c.l.b16 %v706
      %v807 = vunpack.c.l.b16 %v707
      %v808 = vunpack.c.l.b16 %v708
      %v809 = vunpack.c.l.b16 %v709
      %v810 = vunpack.c.l.b16 %v710
      %v811 = vunpack.c.l.b16 %v711
      %v812 = vunpack.c.l.b16 %v712
      %v813 = vunpack.c.l.b16 %v713
      %v814 = vunpack.c.l.b16 %v714
      %v815 = vunpack.c.l.b16 %v715
      %v816 = vunpack.c.l.b16 %v716
      %v817 = vunpack.c.l.b16 %v717
      %v818 = vunpack.c.l.b16 %v718
      %v819 = vunpack.c.l.b16 %v719
      %v820 = vunpack.c.l.b16 %v720
      %v821 = vunpack.c.l.b16 %v721
      %v822 = vunpack.c.l.b16 %v722
      %v823 = vunpack.c.l.b16 %v723
      %v824 = vpack.c.b16 %v775, %v774
      %v825 = vpack.c.b16 %v777, %v776
      %v826 = vpack.c.b16 %v779, %v778
      %v827 = vpack.c.b16 %v781, %v780
      %v828 = vpack.c.b16 %v783, %v782
      %v829 = vpack.c.b16 %v785, %v784
      %v830 = vpack.c.b16 %v787, %v786
      %v831 = vpack.c.b16 %v789, %v788
      %v832 = vpack.c.b16 %v791, %v790
      %v833 = vpack.c.b16 %v793, %v792
      %v834 = vpack.c.b16 %v795, %v794
      %v835 = vpack.c.b16 %v797, %v796
      %v836 = vpack.c.b16 %v799, %v798
      %v837 = vpack.c.b16 %v801, %v800
      %v838 = vpack.c.b16 %v803, %v802
      %v839 = vpack.c.b16 %v805, %v804
      %v840 = vpack.c.b16 %v807, %v806
      %v841 = vpack.c.b16 %v809, %v808
      %v842 = vpack.c.b16 %v811, %v810
      %v843 = vpack.c.b16 %v813, %v812
      %v844 = vpack.c.b16 %v815, %v814
      %v845 = vpack.c.b16 %v817, %v816
      %v846 = vpack.c.b16 %v819, %v818
      %v847 = vpack.c.b16 %v821, %v820
      %v848 = vpack.c.b16 %v823, %v822
      %874 = vmatprep.subr.bf16.mxu0 %v673
      %875 = vmatpush1.bf16.msra.mxu0 %v672
      %876 = vmatprep.subr.bf16.mxu0 %v671
      %877 = vmatpush1.bf16.msra.mxu0 %v670
      %878 = vmatprep.subr.bf16.mxu0 %v669
      %879 = vmatpush1.bf16.msra.mxu0 %v668
      %880 = vmatprep.subr.bf16.mxu0 %v667
      %881 = vmatpush1.bf16.msra.mxu0 %v666
      %882 = vmatprep.subr.bf16.mxu0 %v665
      %883 = vmatpush1.bf16.msra.mxu0 %v664
      %884 = vmatprep.subr.bf16.mxu0 %v663
      %885 = vmatpush1.bf16.msra.mxu0 %v662
      %886 = vmatprep.subr.bf16.mxu0 %v661
      %887 = vmatpush1.bf16.msra.mxu0 %v660
      %888 = vmatprep.subr.bf16.mxu0 %v659
      %889 = vmatpush1.bf16.msra.mxu0 %v658
      %890 = vmatprep.subr.bf16.mxu0 0
      %891 = vmatpush2.bf16.msra.mxu0 0
      %892 = vmatprep.subr.bf16.mxu0 0
      %893 = vmatpush2.bf16.msra.mxu0 0
      %894 = vmatprep.subr.bf16.mxu0 0
      %895 = vmatpush2.bf16.msra.mxu0 0
      %896 = vmatprep.subr.bf16.mxu0 0
      %897 = vmatpush2.bf16.msra.mxu0 0
      %898 = vmatprep.subr.bf16.mxu0 0
      %899 = vmatpush2.bf16.msra.mxu0 0
      %900 = vmatprep.subr.bf16.mxu0 0
      %901 = vmatpush2.bf16.msra.mxu0 0
      %902 = vmatprep.subr.bf16.mxu0 0
      %903 = vmatpush2.bf16.msra.mxu0 0
      %904 = vmatprep.subr.bf16.mxu0 0
      %905 = vmatpush2.bf16.msra.mxu0 0
      %906 = vmatprep.mubr.bf16.mxu0 0
      %907 = vmatmul.mubr.bf16.gmra.mxu0 %v824
      %v908 = vpop.f32.mrf.mxu0
      %v909 = vadd.f32 0.0, %v908
      %v910 = vpop.f32.mrf.mxu0
      %v911 = vadd.f32 0.0, %v910
      %v912 = vpop.f32.mrf.mxu0
      %v913 = vadd.f32 0.0, %v912
      %v914 = vpop.f32.mrf.mxu0
      %v915 = vadd.f32 0.0, %v914
      %916 = vmatprep.mubr.bf16.mxu0 0
      %917 = vmatmul.mubr.bf16.gmra.mxu0 %v825
      %v918 = vpop.f32.mrf.mxu0
      %v919 = vadd.f32 0.0, %v918
      %v920 = vpop.f32.mrf.mxu0
      %v921 = vadd.f32 0.0, %v920
      %v922 = vpop.f32.mrf.mxu0
      %v923 = vadd.f32 0.0, %v922
      %v924 = vpop.f32.mrf.mxu0
      %v925 = vadd.f32 0.0, %v924
      %926 = vmatprep.mubr.bf16.mxu0 0
      %927 = vmatmul.mubr.bf16.gmra.mxu0 %v826
      %v928 = vpop.f32.mrf.mxu0
      %v929 = vadd.f32 0.0, %v928
      %v930 = vpop.f32.mrf.mxu0
      %v931 = vadd.f32 0.0, %v930
      %v932 = vpop.f32.mrf.mxu0
      %v933 = vadd.f32 0.0, %v932
      %v934 = vpop.f32.mrf.mxu0
      %v935 = vadd.f32 0.0, %v934
      %936 = vmatprep.mubr.bf16.mxu0 0
      %937 = vmatmul.mubr.bf16.gmra.mxu0 %v827
      %v938 = vpop.f32.mrf.mxu0
      %v939 = vadd.f32 0.0, %v938
      %v940 = vpop.f32.mrf.mxu0
      %v941 = vadd.f32 0.0, %v940
      %v942 = vpop.f32.mrf.mxu0
      %v943 = vadd.f32 0.0, %v942
      %v944 = vpop.f32.mrf.mxu0
      %v945 = vadd.f32 0.0, %v944
      %946 = vmatprep.mubr.bf16.mxu0 0
      %947 = vmatmul.mubr.bf16.gmra.mxu0 %v828
      %v948 = vpop.f32.mrf.mxu0
      %v949 = vadd.f32 0.0, %v948
      %v950 = vpop.f32.mrf.mxu0
      %v951 = vadd.f32 0.0, %v950
      %v952 = vpop.f32.mrf.mxu0
      %v953 = vadd.f32 0.0, %v952
      %v954 = vpop.f32.mrf.mxu0
      %v955 = vadd.f32 0.0, %v954
      %956 = vmatprep.mubr.bf16.mxu0 0
      %957 = vmatmul.mubr.bf16.gmra.mxu0 %v829
      %v958 = vpop.f32.mrf.mxu0
      %v959 = vadd.f32 0.0, %v958
      %v960 = vpop.f32.mrf.mxu0
      %v961 = vadd.f32 0.0, %v960
      %v962 = vpop.f32.mrf.mxu0
      %v963 = vadd.f32 0.0, %v962
      %v964 = vpop.f32.mrf.mxu0
      %v965 = vadd.f32 0.0, %v964
      %966 = vmatprep.mubr.bf16.mxu0 0
      %967 = vmatmul.mubr.bf16.gmra.mxu0 %v830
      %v968 = vpop.f32.mrf.mxu0
      %v969 = vadd.f32 0.0, %v968
      %v970 = vpop.f32.mrf.mxu0
      %v971 = vadd.f32 0.0, %v970
      %v972 = vpop.f32.mrf.mxu0
      %v973 = vadd.f32 0.0, %v972
      %v974 = vpop.f32.mrf.mxu0
      %v975 = vadd.f32 0.0, %v974
      %976 = vmatprep.mubr.bf16.mxu0 0
      %977 = vmatmul.mubr.bf16.gmra.mxu0 %v831
      %v978 = vpop.f32.mrf.mxu0
      %v979 = vadd.f32 0.0, %v978
      %v980 = vpop.f32.mrf.mxu0
      %v981 = vadd.f32 0.0, %v980
      %v982 = vpop.f32.mrf.mxu0
      %v983 = vadd.f32 0.0, %v982
      %v984 = vpop.f32.mrf.mxu0
      %v985 = vadd.f32 0.0, %v984
      %986 = vmatprep.mubr.bf16.mxu0 0
      %987 = vmatmul.mubr.bf16.gmra.mxu0 %v832
      %v988 = vpop.f32.mrf.mxu0
      %v989 = vadd.f32 0.0, %v988
      %v990 = vpop.f32.mrf.mxu0
      %v991 = vadd.f32 0.0, %v990
      %v992 = vpop.f32.mrf.mxu0
      %v993 = vadd.f32 0.0, %v992
      %v994 = vpop.f32.mrf.mxu0
      %v995 = vadd.f32 0.0, %v994
      %996 = vmatprep.mubr.bf16.mxu0 0
      %997 = vmatmul.mubr.bf16.gmra.mxu0 %v833
      %v998 = vpop.f32.mrf.mxu0
      %v999 = vadd.f32 0.0, %v998
      %v1000 = vpop.f32.mrf.mxu0
      %v1001 = vadd.f32 0.0, %v1000
      %v1002 = vpop.f32.mrf.mxu0
      %v1003 = vadd.f32 0.0, %v1002
      %v1004 = vpop.f32.mrf.mxu0
      %v1005 = vadd.f32 0.0, %v1004
      %1006 = vmatprep.mubr.bf16.mxu0 0
      %1007 = vmatmul.mubr.bf16.gmra.mxu0 %v834
      %v1008 = vpop.f32.mrf.mxu0
      %v1009 = vadd.f32 0.0, %v1008
      %v1010 = vpop.f32.mrf.mxu0
      %v1011 = vadd.f32 0.0, %v1010
      %v1012 = vpop.f32.mrf.mxu0
      %v1013 = vadd.f32 0.0, %v1012
      %v1014 = vpop.f32.mrf.mxu0
      %v1015 = vadd.f32 0.0, %v1014
      %1016 = vmatprep.mubr.bf16.mxu0 0
      %1017 = vmatmul.mubr.bf16.gmra.mxu0 %v835
      %v1018 = vpop.f32.mrf.mxu0
      %v1019 = vadd.f32 0.0, %v1018
      %v1020 = vpop.f32.mrf.mxu0
      %v1021 = vadd.f32 0.0, %v1020
      %v1022 = vpop.f32.mrf.mxu0
      %v1023 = vadd.f32 0.0, %v1022
      %v1024 = vpop.f32.mrf.mxu0
      %v1025 = vadd.f32 0.0, %v1024
      %1026 = vmatprep.mubr.bf16.mxu0 0
      %1027 = vmatmul.mubr.bf16.gmra.mxu0 %v836
      %v1028 = vpop.f32.mrf.mxu0
      %v1029 = vadd.f32 0.0, %v1028
      %v1030 = vpop.f32.mrf.mxu0
      %v1031 = vadd.f32 0.0, %v1030
      %v1032 = vpop.f32.mrf.mxu0
      %v1033 = vadd.f32 0.0, %v1032
      %v1034 = vpop.f32.mrf.mxu0
      %v1035 = vadd.f32 0.0, %v1034
      %1036 = vmatprep.mubr.bf16.mxu0 0
      %1037 = vmatmul.mubr.bf16.gmra.mxu0 %v837
      %v1038 = vpop.f32.mrf.mxu0
      %v1039 = vadd.f32 0.0, %v1038
      %v1040 = vpop.f32.mrf.mxu0
      %v1041 = vadd.f32 0.0, %v1040
      %v1042 = vpop.f32.mrf.mxu0
      %v1043 = vadd.f32 0.0, %v1042
      %v1044 = vpop.f32.mrf.mxu0
      %v1045 = vadd.f32 0.0, %v1044
      %1046 = vmatprep.mubr.bf16.mxu0 0
      %1047 = vmatmul.mubr.bf16.gmra.mxu0 %v838
      %v1048 = vpop.f32.mrf.mxu0
      %v1049 = vadd.f32 0.0, %v1048
      %v1050 = vpop.f32.mrf.mxu0
      %v1051 = vadd.f32 0.0, %v1050
      %v1052 = vpop.f32.mrf.mxu0
      %v1053 = vadd.f32 0.0, %v1052
      %v1054 = vpop.f32.mrf.mxu0
      %v1055 = vadd.f32 0.0, %v1054
      %1056 = vmatprep.mubr.bf16.mxu0 0
      %1057 = vmatmul.mubr.bf16.gmra.mxu0 %v839
      %v1058 = vpop.f32.mrf.mxu0
      %v1059 = vadd.f32 0.0, %v1058
      %v1060 = vpop.f32.mrf.mxu0
      %v1061 = vadd.f32 0.0, %v1060
      %v1062 = vpop.f32.mrf.mxu0
      %v1063 = vadd.f32 0.0, %v1062
      %v1064 = vpop.f32.mrf.mxu0
      %v1065 = vadd.f32 0.0, %v1064
      %1066 = vmatprep.mubr.bf16.mxu0 0
      %1067 = vmatmul.mubr.bf16.gmra.mxu0 %v840
      %v1068 = vpop.f32.mrf.mxu0
      %v1069 = vadd.f32 0.0, %v1068
      %v1070 = vpop.f32.mrf.mxu0
      %v1071 = vadd.f32 0.0, %v1070
      %v1072 = vpop.f32.mrf.mxu0
      %v1073 = vadd.f32 0.0, %v1072
      %v1074 = vpop.f32.mrf.mxu0
      %v1075 = vadd.f32 0.0, %v1074
      %1076 = vmatprep.mubr.bf16.mxu0 0
      %1077 = vmatmul.mubr.bf16.gmra.mxu0 %v841
      %v1078 = vpop.f32.mrf.mxu0
      %v1079 = vadd.f32 0.0, %v1078
      %v1080 = vpop.f32.mrf.mxu0
      %v1081 = vadd.f32 0.0, %v1080
      %v1082 = vpop.f32.mrf.mxu0
      %v1083 = vadd.f32 0.0, %v1082
      %v1084 = vpop.f32.mrf.mxu0
      %v1085 = vadd.f32 0.0, %v1084
      %1086 = vmatprep.mubr.bf16.mxu0 0
      %1087 = vmatmul.mubr.bf16.gmra.mxu0 %v842
      %v1088 = vpop.f32.mrf.mxu0
      %v1089 = vadd.f32 0.0, %v1088
      %v1090 = vpop.f32.mrf.mxu0
      %v1091 = vadd.f32 0.0, %v1090
      %v1092 = vpop.f32.mrf.mxu0
      %v1093 = vadd.f32 0.0, %v1092
      %v1094 = vpop.f32.mrf.mxu0
      %v1095 = vadd.f32 0.0, %v1094
      %1096 = vmatprep.mubr.bf16.mxu0 0
      %1097 = vmatmul.mubr.bf16.gmra.mxu0 %v843
      %v1098 = vpop.f32.mrf.mxu0
      %v1099 = vadd.f32 0.0, %v1098
      %v1100 = vpop.f32.mrf.mxu0
      %v1101 = vadd.f32 0.0, %v1100
      %v1102 = vpop.f32.mrf.mxu0
      %v1103 = vadd.f32 0.0, %v1102
      %v1104 = vpop.f32.mrf.mxu0
      %v1105 = vadd.f32 0.0, %v1104
      %1106 = vmatprep.mubr.bf16.mxu0 0
      %1107 = vmatmul.mubr.bf16.gmra.mxu0 %v844
      %v1108 = vpop.f32.mrf.mxu0
      %v1109 = vadd.f32 0.0, %v1108
      %v1110 = vpop.f32.mrf.mxu0
      %v1111 = vadd.f32 0.0, %v1110
      %v1112 = vpop.f32.mrf.mxu0
      %v1113 = vadd.f32 0.0, %v1112
      %v1114 = vpop.f32.mrf.mxu0
      %v1115 = vadd.f32 0.0, %v1114
      %1116 = vmatprep.mubr.bf16.mxu0 0
      %1117 = vmatmul.mubr.bf16.gmra.mxu0 %v845
      %v1118 = vpop.f32.mrf.mxu0
      %v1119 = vadd.f32 0.0, %v1118
      %v1120 = vpop.f32.mrf.mxu0
      %v1121 = vadd.f32 0.0, %v1120
      %v1122 = vpop.f32.mrf.mxu0
      %v1123 = vadd.f32 0.0, %v1122
      %v1124 = vpop.f32.mrf.mxu0
      %v1125 = vadd.f32 0.0, %v1124
      %1126 = vmatprep.mubr.bf16.mxu0 0
      %1127 = vmatmul.mubr.bf16.gmra.mxu0 %v846
      %v1128 = vpop.f32.mrf.mxu0
      %v1129 = vadd.f32 0.0, %v1128
      %v1130 = vpop.f32.mrf.mxu0
      %v1131 = vadd.f32 0.0, %v1130
      %v1132 = vpop.f32.mrf.mxu0
      %v1133 = vadd.f32 0.0, %v1132
      %v1134 = vpop.f32.mrf.mxu0
      %v1135 = vadd.f32 0.0, %v1134
      %1136 = vmatprep.mubr.bf16.mxu0 0
      %1137 = vmatmul.mubr.bf16.gmra.mxu0 %v847
      %v1138 = vpop.f32.mrf.mxu0
      %v1139 = vadd.f32 0.0, %v1138
      %v1140 = vpop.f32.mrf.mxu0
      %v1141 = vadd.f32 0.0, %v1140
      %v1142 = vpop.f32.mrf.mxu0
      %v1143 = vadd.f32 0.0, %v1142
      %v1144 = vpop.f32.mrf.mxu0
      %v1145 = vadd.f32 0.0, %v1144
      %1146 = vmatprep.mubr.bf16.mxu0 0
      %1147 = vmatmul.mubr.bf16.gmra.mxu0 %v848
      %v1148 = vpop.f32.mrf.mxu0
      %v1149 = vadd.f32 0.0, %v1148
      %v1150 = vpop.f32.mrf.mxu0
      %v1151 = vadd.f32 0.0, %v1150
      %v1152 = vpop.f32.mrf.mxu0
      %v1153 = vadd.f32 0.0, %v1152
      %v1154 = vpop.f32.mrf.mxu0
      %v1155 = vadd.f32 0.0, %v1154
      %1156 = vdwg.mxu0
      %v1157 = vpack.c.bf16 %v913, %v909
      %v1158 = vpack.c.bf16 %v915, %v911
      %v1159 = vpack.c.bf16 %v923, %v919
      %v1160 = vpack.c.bf16 %v925, %v921
      %v1161 = vpack.c.bf16 %v933, %v929
      %v1162 = vpack.c.bf16 %v935, %v931
      %v1163 = vpack.c.bf16 %v943, %v939
      %v1164 = vpack.c.bf16 %v945, %v941
      %v1165 = vpack.c.bf16 %v953, %v949
      %v1166 = vpack.c.bf16 %v955, %v951
      %v1167 = vpack.c.bf16 %v963, %v959
      %v1168 = vpack.c.bf16 %v965, %v961
      %v1169 = vpack.c.bf16 %v973, %v969
      %v1170 = vpack.c.bf16 %v975, %v971
      %v1171 = vpack.c.bf16 %v983, %v979
      %v1172 = vpack.c.bf16 %v985, %v981
      %v1173 = vpack.c.bf16 %v993, %v989
      %v1174 = vpack.c.bf16 %v995, %v991
      %v1175 = vpack.c.bf16 %v1003, %v999
      %v1176 = vpack.c.bf16 %v1005, %v1001
      %v1177 = vpack.c.bf16 %v1013, %v1009
      %v1178 = vpack.c.bf16 %v1015, %v1011
      %v1179 = vpack.c.bf16 %v1023, %v1019
      %v1180 = vpack.c.bf16 %v1025, %v1021
      %v1181 = vpack.c.bf16 %v1033, %v1029
      %v1182 = vpack.c.bf16 %v1035, %v1031
      %v1183 = vpack.c.bf16 %v1043, %v1039
      %v1184 = vpack.c.bf16 %v1045, %v1041
      %v1185 = vpack.c.bf16 %v1053, %v1049
      %v1186 = vpack.c.bf16 %v1055, %v1051
      %v1187 = vpack.c.bf16 %v1063, %v1059
      %v1188 = vpack.c.bf16 %v1065, %v1061
      %v1189 = vpack.c.bf16 %v1073, %v1069
      %v1190 = vpack.c.bf16 %v1075, %v1071
      %v1191 = vpack.c.bf16 %v1083, %v1079
      %v1192 = vpack.c.bf16 %v1085, %v1081
      %v1193 = vpack.c.bf16 %v1093, %v1089
      %v1194 = vpack.c.bf16 %v1095, %v1091
      %v1195 = vpack.c.bf16 %v1103, %v1099
      %v1196 = vpack.c.bf16 %v1105, %v1101
      %v1197 = vpack.c.bf16 %v1113, %v1109
      %v1198 = vpack.c.bf16 %v1115, %v1111
      %v1199 = vpack.c.bf16 %v1123, %v1119
      %v1200 = vpack.c.bf16 %v1125, %v1121
      %v1201 = vpack.c.bf16 %v1133, %v1129
      %v1202 = vpack.c.bf16 %v1135, %v1131
      %v1203 = vpack.c.bf16 %v1143, %v1139
      %v1204 = vpack.c.bf16 %v1145, %v1141
      %v1205 = vpack.c.bf16 %v1153, %v1149
      %v1206 = vpack.c.bf16 %v1155, %v1151
      %v1207 = vld [vmem:[%s5] sm:$0xf]
      %v1208 = vld [vmem:[%s5 + $0x4] sm:$0xf]
      %v1209 = vld [vmem:[%s5 + $0x8] sm:$0xf]
      %v1210 = vld [vmem:[%s5 + $0xc] sm:$0xf]
      %v1211 = vld [vmem:[%s5 + $0x10] sm:$0xf]
      %v1212 = vld [vmem:[%s5 + $0x14] sm:$0xf]
      %v1213 = vld [vmem:[%s5 + $0x18] sm:$0xf]
      %v1214 = vld [vmem:[%s5 + $0x1c] sm:$0xf]
      %v1215 = vld [vmem:[%s5 + $0x20] sm:$0xf]
      %v1216 = vld [vmem:[%s5 + $0x24] sm:$0xf]
      %v1217 = vld [vmem:[%s5 + $0x28] sm:$0xf]
      %v1218 = vld [vmem:[%s5 + $0x2c] sm:$0xf]
      %v1219 = vld [vmem:[%s5 + $0x30] sm:$0xf]
      %v1220 = vld [vmem:[%s5 + $0x34] sm:$0xf]
      %v1221 = vld [vmem:[%s5 + $0x38] sm:$0xf]
      %v1222 = vld [vmem:[%s5 + $0x3c] sm:$0xf]
      %v1223 = vld [vmem:[%s5 + $0x40] sm:$0xf]
      %v1224 = vld [vmem:[%s5 + $0x44] sm:$0xf]
      %v1225 = vld [vmem:[%s5 + $0x48] sm:$0xf]
      %v1226 = vld [vmem:[%s5 + $0x4c] sm:$0xf]
      %v1227 = vld [vmem:[%s5 + $0x50] sm:$0xf]
      %v1228 = vld [vmem:[%s5 + $0x54] sm:$0xf]
      %v1229 = vld [vmem:[%s5 + $0x58] sm:$0xf]
      %v1230 = vld [vmem:[%s5 + $0x5c] sm:$0xf]
      %v1231 = vld [vmem:[%s5 + $0x60] sm:$0xf]
      %v1232 = vld [vmem:[%s5 + $0x64] sm:$0xf]
      %v1233 = vld [vmem:[%s5 + $0x68] sm:$0xf]
      %v1234 = vld [vmem:[%s5 + $0x6c] sm:$0xf]
      %v1235 = vld [vmem:[%s5 + $0x70] sm:$0xf]
      %v1236 = vld [vmem:[%s5 + $0x74] sm:$0xf]
      %v1237 = vld [vmem:[%s5 + $0x78] sm:$0xf]
      %v1238 = vld [vmem:[%s5 + $0x7c] sm:$0xf]
      %v1239 = vld [vmem:[%s6] sm:$0x1]
      %v1241 = vlaneseq
      %v1242 = vshrl.u32 %v1241, 7
      %v1243 = vsub.s32 0, %v1242
      %v1244 = vrot.slane %v1239, %v1243
      %v1278 = vunpack.c.l.b16 %v1207
      %v1279 = vunpack.c.l.b16 %v1208
      %v1280 = vunpack.c.l.b16 %v1209
      %v1281 = vunpack.c.l.b16 %v1210
      %v1282 = vunpack.c.l.b16 %v1211
      %v1283 = vunpack.c.l.b16 %v1212
      %v1284 = vunpack.c.l.b16 %v1213
      %v1285 = vunpack.c.l.b16 %v1214
      %v1286 = vunpack.c.l.b16 %v1215
      %v1287 = vunpack.c.l.b16 %v1216
      %v1288 = vunpack.c.l.b16 %v1217
      %v1289 = vunpack.c.l.b16 %v1218
      %v1290 = vunpack.c.l.b16 %v1219
      %v1291 = vunpack.c.l.b16 %v1220
      %v1292 = vunpack.c.l.b16 %v1221
      %v1293 = vunpack.c.l.b16 %v1222
      %v1294 = vunpack.c.l.b16 %v1223
      %v1295 = vunpack.c.l.b16 %v1224
      %v1296 = vunpack.c.l.b16 %v1225
      %v1297 = vunpack.c.l.b16 %v1226
      %v1298 = vunpack.c.l.b16 %v1227
      %v1299 = vunpack.c.l.b16 %v1228
      %v1300 = vunpack.c.l.b16 %v1229
      %v1301 = vunpack.c.l.b16 %v1230
      %v1302 = vunpack.c.l.b16 %v1231
      %v1303 = vunpack.c.l.b16 %v1232
      %v1304 = vunpack.c.l.b16 %v1233
      %v1305 = vunpack.c.l.b16 %v1234
      %v1306 = vunpack.c.l.b16 %v1235
      %v1307 = vunpack.c.l.b16 %v1236
      %v1308 = vunpack.c.l.b16 %v1237
      %v1309 = vunpack.c.l.b16 %v1238
      %v1310 = vpack.c.b16 %v1279, %v1278
      %v1311 = vpack.c.b16 %v1281, %v1280
      %v1312 = vpack.c.b16 %v1283, %v1282
      %v1313 = vpack.c.b16 %v1285, %v1284
      %v1314 = vpack.c.b16 %v1287, %v1286
      %v1315 = vpack.c.b16 %v1289, %v1288
      %v1316 = vpack.c.b16 %v1291, %v1290
      %v1317 = vpack.c.b16 %v1293, %v1292
      %v1318 = vpack.c.b16 %v1295, %v1294
      %v1319 = vpack.c.b16 %v1297, %v1296
      %v1320 = vpack.c.b16 %v1299, %v1298
      %v1321 = vpack.c.b16 %v1301, %v1300
      %v1322 = vpack.c.b16 %v1303, %v1302
      %v1323 = vpack.c.b16 %v1305, %v1304
      %v1324 = vpack.c.b16 %v1307, %v1306
      %v1325 = vpack.c.b16 %v1309, %v1308
      %1342 = vmatprep.subr.bf16.mxu0 0
      %1343 = vmatpush1.bf16.msra.mxu0 %v1317
      %1344 = vmatprep.subr.bf16.mxu0 0
      %1345 = vmatpush1.bf16.msra.mxu0 %v1316
      %1346 = vmatprep.subr.bf16.mxu0 0
      %1347 = vmatpush1.bf16.msra.mxu0 %v1315
      %1348 = vmatprep.subr.bf16.mxu0 0
      %1349 = vmatpush1.bf16.msra.mxu0 %v1314
      %1350 = vmatprep.subr.bf16.mxu0 0
      %1351 = vmatpush1.bf16.msra.mxu0 %v1313
      %1352 = vmatprep.subr.bf16.mxu0 0
      %1353 = vmatpush1.bf16.msra.mxu0 %v1312
      %1354 = vmatprep.subr.bf16.mxu0 0
      %1355 = vmatpush1.bf16.msra.mxu0 %v1311
      %1356 = vmatprep.subr.bf16.mxu0 0
      %1357 = vmatpush1.bf16.msra.mxu0 %v1310
      %1358 = vmatprep.subr.bf16.mxu0 0
      %1359 = vmatpush2.bf16.msra.mxu0 %v1325
      %1360 = vmatprep.subr.bf16.mxu0 0
      %1361 = vmatpush2.bf16.msra.mxu0 %v1324
      %1362 = vmatprep.subr.bf16.mxu0 0
      %1363 = vmatpush2.bf16.msra.mxu0 %v1323
      %1364 = vmatprep.subr.bf16.mxu0 0
      %1365 = vmatpush2.bf16.msra.mxu0 %v1322
      %1366 = vmatprep.subr.bf16.mxu0 0
      %1367 = vmatpush2.bf16.msra.mxu0 %v1321
      %1368 = vmatprep.subr.bf16.mxu0 0
      %1369 = vmatpush2.bf16.msra.mxu0 %v1320
      %1370 = vmatprep.subr.bf16.mxu0 0
      %1371 = vmatpush2.bf16.msra.mxu0 %v1319
      %1372 = vmatprep.subr.bf16.mxu0 0
      %1373 = vmatpush2.bf16.msra.mxu0 %v1318
      %1374 = vmatprep.mubr.bf16.mxu0 %v1158
      %1375 = vmatmul.mubr.bf16.gmra.mxu0 %v1157
      %v1376 = vpop.f32.mrf.mxu0
      %v1377 = vadd.f32 %v1244, %v1376
      %v1378 = vpop.f32.mrf.mxu0
      %v1379 = vpop.f32.mrf.mxu0
      %v1380 = vadd.f32 %v1244, %v1379
      %v1381 = vpop.f32.mrf.mxu0
      %1382 = vmatprep.mubr.bf16.mxu0 %v1160
      %1383 = vmatmul.mubr.bf16.gmra.mxu0 %v1159
      %v1384 = vpop.f32.mrf.mxu0
      %v1385 = vadd.f32 %v1244, %v1384
      %v1386 = vpop.f32.mrf.mxu0
      %v1387 = vpop.f32.mrf.mxu0
      %v1388 = vadd.f32 %v1244, %v1387
      %v1389 = vpop.f32.mrf.mxu0
      %1390 = vmatprep.mubr.bf16.mxu0 %v1162
      %1391 = vmatmul.mubr.bf16.gmra.mxu0 %v1161
      %v1392 = vpop.f32.mrf.mxu0
      %v1393 = vadd.f32 %v1244, %v1392
      %v1394 = vpop.f32.mrf.mxu0
      %v1395 = vpop.f32.mrf.mxu0
      %v1396 = vadd.f32 %v1244, %v1395
      %v1397 = vpop.f32.mrf.mxu0
      %1398 = vmatprep.mubr.bf16.mxu0 %v1164
      %1399 = vmatmul.mubr.bf16.gmra.mxu0 %v1163
      %v1400 = vpop.f32.mrf.mxu0
      %v1401 = vadd.f32 %v1244, %v1400
      %v1402 = vpop.f32.mrf.mxu0
      %v1403 = vpop.f32.mrf.mxu0
      %v1404 = vadd.f32 %v1244, %v1403
      %v1405 = vpop.f32.mrf.mxu0
      %1406 = vmatprep.mubr.bf16.mxu0 %v1166
      %1407 = vmatmul.mubr.bf16.gmra.mxu0 %v1165
      %v1408 = vpop.f32.mrf.mxu0
      %v1409 = vadd.f32 %v1244, %v1408
      %v1410 = vpop.f32.mrf.mxu0
      %v1411 = vpop.f32.mrf.mxu0
      %v1412 = vadd.f32 %v1244, %v1411
      %v1413 = vpop.f32.mrf.mxu0
      %1414 = vmatprep.mubr.bf16.mxu0 %v1168
      %1415 = vmatmul.mubr.bf16.gmra.mxu0 %v1167
      %v1416 = vpop.f32.mrf.mxu0
      %v1417 = vadd.f32 %v1244, %v1416
      %v1418 = vpop.f32.mrf.mxu0
      %v1419 = vpop.f32.mrf.mxu0
      %v1420 = vadd.f32 %v1244, %v1419
      %v1421 = vpop.f32.mrf.mxu0
      %1422 = vmatprep.mubr.bf16.mxu0 %v1170
      %1423 = vmatmul.mubr.bf16.gmra.mxu0 %v1169
      %v1424 = vpop.f32.mrf.mxu0
      %v1425 = vadd.f32 %v1244, %v1424
      %v1426 = vpop.f32.mrf.mxu0
      %v1427 = vpop.f32.mrf.mxu0
      %v1428 = vadd.f32 %v1244, %v1427
      %v1429 = vpop.f32.mrf.mxu0
      %1430 = vmatprep.mubr.bf16.mxu0 %v1172
      %1431 = vmatmul.mubr.bf16.gmra.mxu0 %v1171
      %v1432 = vpop.f32.mrf.mxu0
      %v1433 = vadd.f32 %v1244, %v1432
      %v1434 = vpop.f32.mrf.mxu0
      %v1435 = vpop.f32.mrf.mxu0
      %v1436 = vadd.f32 %v1244, %v1435
      %v1437 = vpop.f32.mrf.mxu0
      %1438 = vmatprep.mubr.bf16.mxu0 %v1174
      %1439 = vmatmul.mubr.bf16.gmra.mxu0 %v1173
      %v1440 = vpop.f32.mrf.mxu0
      %v1441 = vadd.f32 %v1244, %v1440
      %v1442 = vpop.f32.mrf.mxu0
      %v1443 = vpop.f32.mrf.mxu0
      %v1444 = vadd.f32 %v1244, %v1443
      %v1445 = vpop.f32.mrf.mxu0
      %1446 = vmatprep.mubr.bf16.mxu0 %v1176
      %1447 = vmatmul.mubr.bf16.gmra.mxu0 %v1175
      %v1448 = vpop.f32.mrf.mxu0
      %v1449 = vadd.f32 %v1244, %v1448
      %v1450 = vpop.f32.mrf.mxu0
      %v1451 = vpop.f32.mrf.mxu0
      %v1452 = vadd.f32 %v1244, %v1451
      %v1453 = vpop.f32.mrf.mxu0
      %1454 = vmatprep.mubr.bf16.mxu0 %v1178
      %1455 = vmatmul.mubr.bf16.gmra.mxu0 %v1177
      %v1456 = vpop.f32.mrf.mxu0
      %v1457 = vadd.f32 %v1244, %v1456
      %v1458 = vpop.f32.mrf.mxu0
      %v1459 = vpop.f32.mrf.mxu0
      %v1460 = vadd.f32 %v1244, %v1459
      %v1461 = vpop.f32.mrf.mxu0
      %1462 = vmatprep.mubr.bf16.mxu0 %v1180
      %1463 = vmatmul.mubr.bf16.gmra.mxu0 %v1179
      %v1464 = vpop.f32.mrf.mxu0
      %v1465 = vadd.f32 %v1244, %v1464
      %v1466 = vpop.f32.mrf.mxu0
      %v1467 = vpop.f32.mrf.mxu0
      %v1468 = vadd.f32 %v1244, %v1467
      %v1469 = vpop.f32.mrf.mxu0
      %1470 = vmatprep.mubr.bf16.mxu0 %v1182
      %1471 = vmatmul.mubr.bf16.gmra.mxu0 %v1181
      %v1472 = vpop.f32.mrf.mxu0
      %v1473 = vadd.f32 %v1244, %v1472
      %v1474 = vpop.f32.mrf.mxu0
      %v1475 = vpop.f32.mrf.mxu0
      %v1476 = vadd.f32 %v1244, %v1475
      %v1477 = vpop.f32.mrf.mxu0
      %1478 = vmatprep.mubr.bf16.mxu0 %v1184
      %1479 = vmatmul.mubr.bf16.gmra.mxu0 %v1183
      %v1480 = vpop.f32.mrf.mxu0
      %v1481 = vadd.f32 %v1244, %v1480
      %v1482 = vpop.f32.mrf.mxu0
      %v1483 = vpop.f32.mrf.mxu0
      %v1484 = vadd.f32 %v1244, %v1483
      %v1485 = vpop.f32.mrf.mxu0
      %1486 = vmatprep.mubr.bf16.mxu0 %v1186
      %1487 = vmatmul.mubr.bf16.gmra.mxu0 %v1185
      %v1488 = vpop.f32.mrf.mxu0
      %v1489 = vadd.f32 %v1244, %v1488
      %v1490 = vpop.f32.mrf.mxu0
      %v1491 = vpop.f32.mrf.mxu0
      %v1492 = vadd.f32 %v1244, %v1491
      %v1493 = vpop.f32.mrf.mxu0
      %1494 = vmatprep.mubr.bf16.mxu0 %v1188
      %1495 = vmatmul.mubr.bf16.gmra.mxu0 %v1187
      %v1496 = vpop.f32.mrf.mxu0
      %v1497 = vadd.f32 %v1244, %v1496
      %v1498 = vpop.f32.mrf.mxu0
      %v1499 = vpop.f32.mrf.mxu0
      %v1500 = vadd.f32 %v1244, %v1499
      %v1501 = vpop.f32.mrf.mxu0
      %1502 = vmatprep.mubr.bf16.mxu0 %v1190
      %1503 = vmatmul.mubr.bf16.gmra.mxu0 %v1189
      %v1504 = vpop.f32.mrf.mxu0
      %v1505 = vadd.f32 %v1244, %v1504
      %v1506 = vpop.f32.mrf.mxu0
      %v1507 = vpop.f32.mrf.mxu0
      %v1508 = vadd.f32 %v1244, %v1507
      %v1509 = vpop.f32.mrf.mxu0
      %1510 = vmatprep.mubr.bf16.mxu0 %v1192
      %1511 = vmatmul.mubr.bf16.gmra.mxu0 %v1191
      %v1512 = vpop.f32.mrf.mxu0
      %v1513 = vadd.f32 %v1244, %v1512
      %v1514 = vpop.f32.mrf.mxu0
      %v1515 = vpop.f32.mrf.mxu0
      %v1516 = vadd.f32 %v1244, %v1515
      %v1517 = vpop.f32.mrf.mxu0
      %1518 = vmatprep.mubr.bf16.mxu0 %v1194
      %1519 = vmatmul.mubr.bf16.gmra.mxu0 %v1193
      %v1520 = vpop.f32.mrf.mxu0
      %v1521 = vadd.f32 %v1244, %v1520
      %v1522 = vpop.f32.mrf.mxu0
      %v1523 = vpop.f32.mrf.mxu0
      %v1524 = vadd.f32 %v1244, %v1523
      %v1525 = vpop.f32.mrf.mxu0
      %1526 = vmatprep.mubr.bf16.mxu0 %v1196
      %1527 = vmatmul.mubr.bf16.gmra.mxu0 %v1195
      %v1528 = vpop.f32.mrf.mxu0
      %v1529 = vadd.f32 %v1244, %v1528
      %v1530 = vpop.f32.mrf.mxu0
      %v1531 = vpop.f32.mrf.mxu0
      %v1532 = vadd.f32 %v1244, %v1531
      %v1533 = vpop.f32.mrf.mxu0
      %1534 = vmatprep.mubr.bf16.mxu0 %v1198
      %1535 = vmatmul.mubr.bf16.gmra.mxu0 %v1197
      %v1536 = vpop.f32.mrf.mxu0
      %v1537 = vadd.f32 %v1244, %v1536
      %v1538 = vpop.f32.mrf.mxu0
      %v1539 = vpop.f32.mrf.mxu0
      %v1540 = vadd.f32 %v1244, %v1539
      %v1541 = vpop.f32.mrf.mxu0
      %1542 = vmatprep.mubr.bf16.mxu0 %v1200
      %1543 = vmatmul.mubr.bf16.gmra.mxu0 %v1199
      %v1544 = vpop.f32.mrf.mxu0
      %v1545 = vadd.f32 %v1244, %v1544
      %v1546 = vpop.f32.mrf.mxu0
      %v1547 = vpop.f32.mrf.mxu0
      %v1548 = vadd.f32 %v1244, %v1547
      %v1549 = vpop.f32.mrf.mxu0
      %1550 = vmatprep.mubr.bf16.mxu0 %v1202
      %1551 = vmatmul.mubr.bf16.gmra.mxu0 %v1201
      %v1552 = vpop.f32.mrf.mxu0
      %v1553 = vadd.f32 %v1244, %v1552
      %v1554 = vpop.f32.mrf.mxu0
      %v1555 = vpop.f32.mrf.mxu0
      %v1556 = vadd.f32 %v1244, %v1555
      %v1557 = vpop.f32.mrf.mxu0
      %1558 = vmatprep.mubr.bf16.mxu0 %v1204
      %1559 = vmatmul.mubr.bf16.gmra.mxu0 %v1203
      %v1560 = vpop.f32.mrf.mxu0
      %v1561 = vadd.f32 %v1244, %v1560
      %v1562 = vpop.f32.mrf.mxu0
      %v1563 = vpop.f32.mrf.mxu0
      %v1564 = vadd.f32 %v1244, %v1563
      %v1565 = vpop.f32.mrf.mxu0
      %1566 = vmatprep.mubr.bf16.mxu0 %v1206
      %1567 = vmatmul.mubr.bf16.gmra.mxu0 %v1205
      %v1568 = vpop.f32.mrf.mxu0
      %v1569 = vadd.f32 %v1244, %v1568
      %v1570 = vpop.f32.mrf.mxu0
      %v1571 = vpop.f32.mrf.mxu0
      %v1572 = vadd.f32 %v1244, %v1571
      %v1573 = vpop.f32.mrf.mxu0
      %1574 = vdwg.mxu0
      %v1575 = vmax.f32 %v1377, 0.0
      %v1576 = vmax.f32 %v1380, 0.0
      %v1577 = vmax.f32 %v1385, 0.0
      %v1578 = vmax.f32 %v1388, 0.0
      %v1579 = vmax.f32 %v1393, 0.0
      %v1580 = vmax.f32 %v1396, 0.0
      %v1581 = vmax.f32 %v1401, 0.0
      %v1582 = vmax.f32 %v1404, 0.0
      %v1583 = vmax.f32 %v1409, 0.0
      %v1584 = vmax.f32 %v1412, 0.0
      %v1585 = vmax.f32 %v1417, 0.0
      %v1586 = vmax.f32 %v1420, 0.0
      %v1587 = vmax.f32 %v1425, 0.0
      %v1588 = vmax.f32 %v1428, 0.0
      %v1589 = vmax.f32 %v1433, 0.0
      %v1590 = vmax.f32 %v1436, 0.0
      %v1591 = vmax.f32 %v1441, 0.0
      %v1592 = vmax.f32 %v1444, 0.0
      %v1593 = vmax.f32 %v1449, 0.0
      %v1594 = vmax.f32 %v1452, 0.0
      %v1595 = vmax.f32 %v1457, 0.0
      %v1596 = vmax.f32 %v1460, 0.0
      %v1597 = vmax.f32 %v1465, 0.0
      %v1598 = vmax.f32 %v1468, 0.0
      %v1599 = vmax.f32 %v1473, 0.0
      %v1600 = vmax.f32 %v1476, 0.0
      %v1601 = vmax.f32 %v1481, 0.0
      %v1602 = vmax.f32 %v1484, 0.0
      %v1603 = vmax.f32 %v1489, 0.0
      %v1604 = vmax.f32 %v1492, 0.0
      %v1605 = vmax.f32 %v1497, 0.0
      %v1606 = vmax.f32 %v1500, 0.0
      %v1607 = vmax.f32 %v1505, 0.0
      %v1608 = vmax.f32 %v1508, 0.0
      %v1609 = vmax.f32 %v1513, 0.0
      %v1610 = vmax.f32 %v1516, 0.0
      %v1611 = vmax.f32 %v1521, 0.0
      %v1612 = vmax.f32 %v1524, 0.0
      %v1613 = vmax.f32 %v1529, 0.0
      %v1614 = vmax.f32 %v1532, 0.0
      %v1615 = vmax.f32 %v1537, 0.0
      %v1616 = vmax.f32 %v1540, 0.0
      %v1617 = vmax.f32 %v1545, 0.0
      %v1618 = vmax.f32 %v1548, 0.0
      %v1619 = vmax.f32 %v1553, 0.0
      %v1620 = vmax.f32 %v1556, 0.0
      %v1621 = vmax.f32 %v1561, 0.0
      %v1622 = vmax.f32 %v1564, 0.0
      %v1623 = vmax.f32 %v1569, 0.0
      %v1624 = vmax.f32 %v1572, 0.0
      %v1625 = vpack.c.bf16 %v1576, %v1575
      %v1626 = vpack.c.bf16 %v1578, %v1577
      %v1627 = vpack.c.bf16 %v1580, %v1579
      %v1628 = vpack.c.bf16 %v1582, %v1581
      %v1629 = vpack.c.bf16 %v1584, %v1583
      %v1630 = vpack.c.bf16 %v1586, %v1585
      %v1631 = vpack.c.bf16 %v1588, %v1587
      %v1632 = vpack.c.bf16 %v1590, %v1589
      %v1633 = vpack.c.bf16 %v1592, %v1591
      %v1634 = vpack.c.bf16 %v1594, %v1593
      %v1635 = vpack.c.bf16 %v1596, %v1595
      %v1636 = vpack.c.bf16 %v1598, %v1597
      %v1637 = vpack.c.bf16 %v1600, %v1599
      %v1638 = vpack.c.bf16 %v1602, %v1601
      %v1639 = vpack.c.bf16 %v1604, %v1603
      %v1640 = vpack.c.bf16 %v1606, %v1605
      %v1641 = vpack.c.bf16 %v1608, %v1607
      %v1642 = vpack.c.bf16 %v1610, %v1609
      %v1643 = vpack.c.bf16 %v1612, %v1611
      %v1644 = vpack.c.bf16 %v1614, %v1613
      %v1645 = vpack.c.bf16 %v1616, %v1615
      %v1646 = vpack.c.bf16 %v1618, %v1617
      %v1647 = vpack.c.bf16 %v1620, %v1619
      %v1648 = vpack.c.bf16 %v1622, %v1621
      %v1649 = vpack.c.bf16 %v1624, %v1623
      %v1650 = vld [vmem:[%s7] sm:$0xf]
      %v1651 = vld [vmem:[%s8] sm:$0xff]
      %1653 = vset.pattern.permute.xlu0 0
      %1654 = vperm.xlu0 %1653, %v1651
      %v1655 = vpop.permute.xlu0 %1654
      %1657 = vmatprep.subr.bf16.mxu0 0
      %1658 = vmatpush1.bf16.xpose.msra.mxu0 %v1632
      %1659 = vmatprep.subr.bf16.mxu0 0
      %1660 = vmatpush1.bf16.xpose.msra.mxu0 %v1631
      %1661 = vmatprep.subr.bf16.mxu0 0
      %1662 = vmatpush1.bf16.xpose.msra.mxu0 %v1630
      %1663 = vmatprep.subr.bf16.mxu0 0
      %1664 = vmatpush1.bf16.xpose.msra.mxu0 %v1629
      %1665 = vmatprep.subr.bf16.mxu0 0
      %1666 = vmatpush1.bf16.xpose.msra.mxu0 %v1628
      %1667 = vmatprep.subr.bf16.mxu0 0
      %1668 = vmatpush1.bf16.xpose.msra.mxu0 %v1627
      %1669 = vmatprep.subr.bf16.mxu0 0
      %1670 = vmatpush1.bf16.xpose.msra.mxu0 %v1626
      %1671 = vmatprep.subr.bf16.mxu0 0
      %1672 = vmatpush1.bf16.xpose.msra.mxu0 %v1625
      %1673 = vmatprep.subr.bf16.mxu0 0
      %1674 = vmatpush2.bf16.xpose.msra.mxu0 %v1640
      %1675 = vmatprep.subr.bf16.mxu0 0
      %1676 = vmatpush2.bf16.xpose.msra.mxu0 %v1639
      %1677 = vmatprep.subr.bf16.mxu0 0
      %1678 = vmatpush2.bf16.xpose.msra.mxu0 %v1638
      %1679 = vmatprep.subr.bf16.mxu0 0
      %1680 = vmatpush2.bf16.xpose.msra.mxu0 %v1637
      %1681 = vmatprep.subr.bf16.mxu0 0
      %1682 = vmatpush2.bf16.xpose.msra.mxu0 %v1636
      %1683 = vmatprep.subr.bf16.mxu0 0
      %1684 = vmatpush2.bf16.xpose.msra.mxu0 %v1635
      %1685 = vmatprep.subr.bf16.mxu0 0
      %1686 = vmatpush2.bf16.xpose.msra.mxu0 %v1634
      %1687 = vmatprep.subr.bf16.mxu0 0
      %1688 = vmatpush2.bf16.xpose.msra.mxu0 %v1633
      %1689 = vmatprep.mubr.bf16.mxu0 0
      %1690 = vmatmul.mubr.bf16.gmra.mxu0 %v1650
      %v1691 = vpop.f32.mrf.mxu0
      %v1692 = vadd.f32 %v1655, %v1691
      %v1693 = vpop.f32.mrf.mxu0
      %v1694 = vadd.f32 %v1655, %v1693
      %v1695 = vpop.f32.mrf.mxu0
      %v1696 = vpop.f32.mrf.mxu0
      %1697 = vdwg.mxu0
      %1698 = vmatprep.subr.bf16.mxu0 0
      %1699 = vmatpush1.bf16.xpose.msra.mxu0 %v1648
      %1700 = vmatprep.subr.bf16.mxu0 0
      %1701 = vmatpush1.bf16.xpose.msra.mxu0 %v1647
      %1702 = vmatprep.subr.bf16.mxu0 0
      %1703 = vmatpush1.bf16.xpose.msra.mxu0 %v1646
      %1704 = vmatprep.subr.bf16.mxu0 0
      %1705 = vmatpush1.bf16.xpose.msra.mxu0 %v1645
      %1706 = vmatprep.subr.bf16.mxu0 0
      %1707 = vmatpush1.bf16.xpose.msra.mxu0 %v1644
      %1708 = vmatprep.subr.bf16.mxu0 0
      %1709 = vmatpush1.bf16.xpose.msra.mxu0 %v1643
      %1710 = vmatprep.subr.bf16.mxu0 0
      %1711 = vmatpush1.bf16.xpose.msra.mxu0 %v1642
      %1712 = vmatprep.subr.bf16.mxu0 0
      %1713 = vmatpush1.bf16.xpose.msra.mxu0 %v1641
      %1714 = vmatprep.subr.bf16.mxu0 0
      %1715 = vmatpush2.bf16.xpose.msra.mxu0 0
      %1716 = vmatprep.subr.bf16.mxu0 0
      %1717 = vmatpush2.bf16.xpose.msra.mxu0 0
      %1718 = vmatprep.subr.bf16.mxu0 0
      %1719 = vmatpush2.bf16.xpose.msra.mxu0 0
      %1720 = vmatprep.subr.bf16.mxu0 0
      %1721 = vmatpush2.bf16.xpose.msra.mxu0 0
      %1722 = vmatprep.subr.bf16.mxu0 0
      %1723 = vmatpush2.bf16.xpose.msra.mxu0 0
      %1724 = vmatprep.subr.bf16.mxu0 0
      %1725 = vmatpush2.bf16.xpose.msra.mxu0 0
      %1726 = vmatprep.subr.bf16.mxu0 0
      %1727 = vmatpush2.bf16.xpose.msra.mxu0 0
      %1728 = vmatprep.subr.bf16.mxu0 0
      %1729 = vmatpush2.bf16.xpose.msra.mxu0 %v1649
      %1730 = vmatprep.mubr.bf16.mxu0 0
      %1731 = vmatmul.mubr.bf16.gmra.mxu0 %v1650
      %v1732 = vpop.f32.mrf.mxu0
      %v1733 = vadd.f32 %v1655, %v1732
      %v1734 = vpop.f32.mrf.mxu0
      %v1735 = vadd.f32 %v1655, %v1734
      %v1736 = vpop.f32.mrf.mxu0
      %v1737 = vpop.f32.mrf.mxu0
      %1738 = vdwg.mxu0
      %1739 = vst [vmem:[%s339] sm:$0xff] %v1692
      %1740 = vst [vmem:[%s339 + $0x8] sm:$0xff] %v1694
      %1741 = vst [vmem:[%s339 + $0x10] sm:$0xff] %v1733
      %vm1742 = vcmask 130048
      %1743 = vst.msk [vmem:[%s339 + $0x18] sm:$0xff] %vm1742, %v1735
      %p1744 = scmp.lt.s32.totalorder %s26, 1
      %s1745 = scalar_select %p1744, %s26, 1
      %s1746 = smul.addr %s1745, 4
      %s1747 = smul.addr %s1746, 8
      %s1748 = scalar_lea.vmem %s9, %s1747
      // Predicated region
      $region53: #{scale_forward.1} parent=51 // pred_check
        %p1749 = pneg %p224
      $region54: #{scale_forward.1} parent=51 // pred_check_branch
        %1751 = sbr.rel (%p1749) target = $region56
      $region55: #{scale_forward.1} parent=51 // pred_region
        _
      $region56: #{scale_forward.1} parent=51 // pred_fallthru
        _
    $region52: #{scale_forward.1} parent=5 // pred_fallthru
      _
    %p1752 = scmp.le.s32.totalorder 2, %s21
    // Predicated region
    $region57: #{scale_forward.1} parent=5 // pred_check
      %p1753 = pneg %p1752
    $region58: #{scale_forward.1} parent=5 // pred_check_branch
      %1755 = sbr.rel (%p1753) target = $region60
    $region59: #{scale_forward.1} parent=5 // pred_region
      %s1756 = ssub.s32 %s21, 2
      // Predicated region
      $region61: #{scale_forward.1} parent=59 // pred_check
        %p1757 = pneg %p230
      $region62: #{scale_forward.1} parent=59 // pred_check_branch
        %1759 = sbr.rel (%p1757) target = $region64
      $region63: #{scale_forward.1} parent=59 // pred_region
        %p1760 = scmp.lt.s32.totalorder %s27, 1
        %s1761 = scalar_select %p1760, %s27, 1
        %s1762 = smul.addr %s1761, 4
        %s1763 = smul.addr %s1762, 8
        %s1764 = scalar_lea.vmem %s9, %s1763
      $region64: #{scale_forward.1} parent=59 // pred_fallthru
        _
    $region60: #{scale_forward.1} parent=5 // pred_fallthru
      _
  $region6: #{scale_forward.1} parent=0 // loop_footer
    %s25 = sadd.s32 1, %s21
  $region7: #{scale_forward.1} parent=0 // loop_footer_branch
    %20 = sbr.rel target = $region3
  $region8: #{scale_forward.1} parent=0 // loop_exit
    _

</llo_original>
